<compile_context>
chip_gen: v7x
topology: tpu7x:2x2x1
jax: 0.10.0
libtpu: 0.0.40
codegen_flags: <defaults>
</compile_context>

<pallas_src>
import functools

import jax
import jax.numpy as jnp
from jax import lax
from jax.experimental import pallas as pl
from jax.experimental.pallas import tpu as pltpu


_COMPUTE_DTYPE = jnp.bfloat16   # MXU operand dtype (accumulation is always f32)
_VMEM_LIMIT = 48 * 1024 * 1024  # > default scoped VMEM on all gens, < v7x 64 MiB physical


def _mha_heads_kernel(q_ref, k_ref, v_ref,
                      wq_ref, bq_ref, wk_ref, bk_ref, wv_ref, bv_ref,
                      attn_ref, outh_ref,
                      qh_ref,
                      *, inv_scale):
    """One (head, k-tile) grid step: per-head projections + scaled-dot-product attention.

    Shapes seen by the kernel (head axis squeezed away by the BlockSpecs):
      q_ref    (n_q, d_in_q) bf16     wq_ref (d_in_q, d_k) bf16    bq_ref (1, d_k) f32
      k_ref    (tk,  d_in_k) bf16     wk_ref (d_in_k, d_k) bf16    bk_ref (1, d_k) f32
      v_ref    (tk,  d_in_v) bf16     wv_ref (d_in_v, d_v) bf16    bv_ref (1, d_v) f32
      attn_ref (n_q, tk) f32          outh_ref (n_q, d_v) f32 (resident accumulator)
      qh_ref   (n_q, d_k) bf16 scratch (persists across the k-tile loop)
    """
    kt = pl.program_id(1)

    @pl.when(kt == 0)
    def _init():
        # Per-head Q projection: computed once per head, reused for every k-tile.
        qh = jnp.dot(q_ref[...], wq_ref[...],
                     preferred_element_type=jnp.float32) + bq_ref[...]
        qh_ref[...] = qh.astype(qh_ref.dtype)
        # Zero the resident per-head output accumulator.
        outh_ref[...] = jnp.zeros_like(outh_ref)

    # Per-k-tile K / V projections (bf16 MXU operands, f32 accumulation).
    kh = (jnp.dot(k_ref[...], wk_ref[...],
                  preferred_element_type=jnp.float32) + bk_ref[...]).astype(_COMPUTE_DTYPE)
    vh = (jnp.dot(v_ref[...], wv_ref[...],
                  preferred_element_type=jnp.float32) + bv_ref[...]).astype(_COMPUTE_DTYPE)

    # u[q, k] = <Q_h[q, :], K_h[k, :]> * (1/sqrt(d_k)); contract the trailing dims
    # directly (no explicit transpose) so the MXU consumes K in its native layout.
    u = lax.dot_general(qh_ref[...], kh, (((1,), (1,)), ((), ())),
                        preferred_element_type=jnp.float32) * inv_scale

    # nn.Softmax(dim=1) of the module == softmax over the QUERY axis (axis 0 here).
    # The full query range is resident, so this is exact for every k column even
    # though the k axis is tiled.
    m = jnp.max(u, axis=0, keepdims=True)
    e = jnp.exp(u - m)
    s = jnp.sum(e, axis=0, keepdims=True)
    attn_t = e * pl.reciprocal(s, approx=True)      # EUP reciprocal (keeps VPU free)

    attn_ref[...] = attn_t.astype(attn_ref.dtype)   # lane-dense (n_q, tk) store

    # Accumulate this k-tile's contribution into the resident per-head f32 output.
    outh_ref[...] += jnp.dot(attn_t.astype(_COMPUTE_DTYPE), vh,
                             preferred_element_type=jnp.float32)


def _fc_kernel(x_ref, w_ref, b_ref, o_ref):
    """Output projection fc_o: y = x @ Wo.T + bo (Wo passed pre-transposed, bf16)."""
    o_ref[...] = (jnp.dot(x_ref[...], w_ref[...],
                          preferred_element_type=jnp.float32)
                  + b_ref[...]).astype(o_ref.dtype)


def _pick_k_tile(n_k, cap=512):
    """Largest k-tile <= cap dividing n_k, multiple of 128 (lane-dense attn stores)."""
    if n_k <= cap:
        return n_k
    for t in range(cap - cap % 128, 0, -128):
        if n_k % t == 0:
            return t
    return n_k            # no suitable divisor: fall back to a single k-tile


def _pick_row_tile(n, cap=512):
    if n <= cap:
        return n
    for t in range(cap - cap % 8, 0, -8):
        if n % t == 0:
            return t
    return n


def multi_head_attention(q, k, v, kp, *, n_head, d_k, d_v, d_o, k_tile=None):
    """Forward pass of the PyTorch MultiHeadAttention module. Returns (attn, out)."""
    n_q, d_in_q = q.shape
    n_k, d_in_k = k.shape
    n_v, d_in_v = v.shape
    assert n_k == n_v, "attention requires n_k == n_v"

    if k_tile is None:
        k_tile = _pick_k_tile(n_k)
    if n_k % k_tile != 0 or (k_tile != n_k and k_tile % 128 != 0):
        k_tile = _pick_k_tile(n_k)        # ignore an invalid override
    n_kt = n_k // k_tile

    inv_scale = 1.0 / (float(d_k) ** 0.5)
    kernel = functools.partial(_mha_heads_kernel, inv_scale=inv_scale)

    attn, out_heads = pl.pallas_call(
        kernel,
        grid=(n_head, n_kt),
        in_specs=[
            pl.BlockSpec((n_q, d_in_q), lambda h, kt: (0, 0)),           # q (resident)
            pl.BlockSpec((k_tile, d_in_k), lambda h, kt: (kt, 0)),       # k (k-tiled)
            pl.BlockSpec((k_tile, d_in_v), lambda h, kt: (kt, 0)),       # v (k-tiled)
            pl.BlockSpec((None, d_in_q, d_k), lambda h, kt: (h, 0, 0)),  # wq  (per head)
            pl.BlockSpec((None, 1, d_k), lambda h, kt: (h, 0, 0)),       # bq
            pl.BlockSpec((None, d_in_k, d_k), lambda h, kt: (h, 0, 0)),  # wk
            pl.BlockSpec((None, 1, d_k), lambda h, kt: (h, 0, 0)),       # bk
            pl.BlockSpec((None, d_in_v, d_v), lambda h, kt: (h, 0, 0)),  # wv
            pl.BlockSpec((None, 1, d_v), lambda h, kt: (h, 0, 0)),       # bv
        ],
        out_specs=(
            pl.BlockSpec((None, n_q, k_tile), lambda h, kt: (h, 0, kt)),  # attn tile
            pl.BlockSpec((None, n_q, d_v), lambda h, kt: (h, 0, 0)),      # per-head out
        ),
        out_shape=(
            jax.ShapeDtypeStruct((n_head, n_q, n_k), jnp.float32),
            jax.ShapeDtypeStruct((n_head, n_q, d_v), jnp.float32),
        ),
        scratch_shapes=[pltpu.VMEM((n_q, d_k), _COMPUTE_DTYPE)],
        compiler_params=pltpu.CompilerParams(
            dimension_semantics=("parallel", "arbitrary"),
            vmem_limit_bytes=_VMEM_LIMIT,
        ),
    )(q.astype(_COMPUTE_DTYPE), k.astype(_COMPUTE_DTYPE), v.astype(_COMPUTE_DTYPE),
      kp["wq3"], kp["bq3"], kp["wk3"], kp["bk3"], kp["wv3"], kp["bv3"])

    # PyTorch: output.view(n_head, n_q, d_v).permute(0,1,2).contiguous().view(n_q, -1)
    # == plain row-major reshape mixing head and query axes (layout glue only).
    # TODO(synk): fuse fc_o into the main kernel's epilogue; it needs an in-kernel
    # (n_q, d_v) -> (n_q // n_head, n_head*d_v) relayout of the head accumulator,
    # which is deferred here to keep lowering simple and portable across v5e/v6e/v7x.
    x = jnp.reshape(out_heads, (n_q, n_head * d_v)).astype(_COMPUTE_DTYPE)

    tq = _pick_row_tile(n_q)
    out = pl.pallas_call(
        _fc_kernel,
        grid=(n_q // tq,),
        in_specs=[
            pl.BlockSpec((tq, n_head * d_v), lambda i: (i, 0)),
            pl.BlockSpec((n_head * d_v, d_o), lambda i: (0, 0)),
            pl.BlockSpec((1, d_o), lambda i: (0, 0)),
        ],
        out_specs=pl.BlockSpec((tq, d_o), lambda i: (i, 0)),
        out_shape=jax.ShapeDtypeStruct((n_q, d_o), jnp.float32),
        compiler_params=pltpu.CompilerParams(
            dimension_semantics=("parallel",),
            vmem_limit_bytes=_VMEM_LIMIT,
        ),
    )(x, kp["wo_t"], kp["bo"])

    return attn, out


def init_params(key, n_head, d_in_q, d_in_v, d_k, d_v, d_o):
    """Deterministic PyTorch-Linear-style init (uniform +/- 1/sqrt(fan_in)), raw layout."""
    ks = jax.random.split(key, 8)

    def linear(kw, kb, fan_in, fan_out):
        bound = 1.0 / (fan_in ** 0.5)
        w = jax.random.uniform(kw, (fan_out, fan_in), jnp.float32, -bound, bound)
        b = jax.random.uniform(kb, (fan_out,), jnp.float32, -bound, bound)
        return w, b

    wq, bq = linear(ks[0], ks[1], d_in_q, n_head * d_k)
    wk, bk = linear(ks[2], ks[3], d_in_q, n_head * d_k)
    wv, bv = linear(ks[4], ks[5], d_in_v, n_head * d_v)
    wo, bo = linear(ks[6], ks[7], n_head * d_v, d_o)
    return dict(wq=wq, bq=bq, wk=wk, bk=bk, wv=wv, bv=bv, wo=wo, bo=bo)


def prepare_params(params, *, n_head, d_k, d_v):
    """Reshape PyTorch-layout Linear params into the per-head, MXU-friendly layout
    consumed by the kernels (weights pre-transposed, split per head, cast to bf16)."""
    d_o = params["wo"].shape[0]

    def per_head(w, d):
        # (n_head*d, d_in) -> W.T (d_in, n_head*d) -> (d_in, n_head, d) -> (n_head, d_in, d)
        return jnp.transpose(w.T.reshape(w.shape[1], n_head, d), (1, 0, 2)).astype(_COMPUTE_DTYPE)

    return dict(
        wq3=per_head(params["wq"], d_k),
        bq3=params["bq"].reshape(n_head, 1, d_k).astype(jnp.float32),
        wk3=per_head(params["wk"], d_k),
        bk3=params["bk"].reshape(n_head, 1, d_k).astype(jnp.float32),
        wv3=per_head(params["wv"], d_v),
        bv3=params["bv"].reshape(n_head, 1, d_v).astype(jnp.float32),
        wo_t=params["wo"].T.astype(_COMPUTE_DTYPE),
        bo=params["bo"].reshape(1, d_o).astype(jnp.float32),
    )


def reference(q, k, v, params, *, n_head, d_k, d_v):
    """Pure-JAX f32 reference mirroring the PyTorch forward exactly."""
    n_q = q.shape[0]
    Q = q @ params["wq"].T + params["bq"]
    K = k @ params["wk"].T + params["bk"]
    V = v @ params["wv"].T + params["bv"]
    Qh = Q.reshape(n_q, n_head, d_k).transpose(1, 0, 2)
    Kh = K.reshape(k.shape[0], n_head, d_k).transpose(1, 0, 2)
    Vh = V.reshape(v.shape[0], n_head, d_v).transpose(1, 0, 2)
    u = jnp.einsum("hqd,hkd->hqk", Qh, Kh) / (float(d_k) ** 0.5)
    attn = jax.nn.softmax(u, axis=1)                  # dim=1 quirk of the module
    out3 = jnp.einsum("hqk,hkd->hqd", attn, Vh)
    x = out3.reshape(n_q, -1)
    out = x @ params["wo"].T + params["bo"]
    return attn, out


if __name__ == "__main__":
    # Small shapes consistent with the module's 2-D (seq, feature) inputs, chosen so
    # both the k-tile reduction loop and the head-parallel grid axis are exercised.
    n_head, d_in, d_k, d_v, d_o = 4, 32, 16, 16, 32
    n_q, n_k, n_v = 64, 256, 256

    key = jax.random.PRNGKey(0)
    kq_, kk_, kv_, kp_ = jax.random.split(key, 4)
    q = jax.random.normal(kq_, (n_q, d_in), jnp.float32)
    k = jax.random.normal(kk_, (n_k, d_in), jnp.float32)
    v = jax.random.normal(kv_, (n_v, d_in), jnp.float32)

    params = init_params(kp_, n_head, d_in, d_in, d_k, d_v, d_o)
    kp = prepare_params(params, n_head=n_head, d_k=d_k, d_v=d_v)

    attn, out = multi_head_attention(q, k, v, kp,
                                     n_head=n_head, d_k=d_k, d_v=d_v, d_o=d_o,
                                     k_tile=128)
    jax.block_until_ready((attn, out))

    attn_r, out_r = reference(q, k, v, params, n_head=n_head, d_k=d_k, d_v=d_v)
    assert attn.shape == (n_head, n_q, n_k) and out.shape == (n_q, d_o)
    assert jnp.allclose(attn, attn_r, atol=2e-2, rtol=2e-2), "attn mismatch"
    assert jnp.allclose(out, out_r, atol=2e-2, rtol=2e-2), "output mismatch"

    print("KERNEL_OK")
</pallas_src>

<mosaic_0001>
module attributes {stable_mosaic.version = 11 : i64} {
  func.func @_mha_heads_kernel(%arg0: i32, %arg1: i32, %arg2: memref<64x32xbf16, #tpu.memory_space<vmem>>, %arg3: memref<128x32xbf16, #tpu.memory_space<vmem>>, %arg4: memref<128x32xbf16, #tpu.memory_space<vmem>>, %arg5: memref<1x32x16xbf16, #tpu.memory_space<vmem>>, %arg6: memref<1x1x16xf32, #tpu.memory_space<vmem>>, %arg7: memref<1x32x16xbf16, #tpu.memory_space<vmem>>, %arg8: memref<1x1x16xf32, #tpu.memory_space<vmem>>, %arg9: memref<1x32x16xbf16, #tpu.memory_space<vmem>>, %arg10: memref<1x1x16xf32, #tpu.memory_space<vmem>>, %arg11: memref<1x64x128xf32, #tpu.memory_space<vmem>>, %arg12: memref<1x64x16xf32, #tpu.memory_space<vmem>>, %arg13: memref<64x16xbf16, #tpu.memory_space<vmem>>) attributes {dimension_semantics = [#tpu.dimension_semantics<parallel>, #tpu.dimension_semantics<arbitrary>], iteration_bounds = array<i64: 4, 2>, scalar_prefetch = 0 : i64, scratch_operands = 1 : i64, tpu.core_type = #tpu.core_type<tc>, window_params = [{pipeline_mode = #tpu.pipeline_mode<synchronous>, transform_indices = @transform_0, window_bounds = array<i64: 64, 32>}, {transform_indices = @transform_1, window_bounds = array<i64: 128, 32>}, {transform_indices = @transform_2, window_bounds = array<i64: 128, 32>}, {transform_indices = @transform_3, window_bounds = array<i64: 1, 32, 16>}, {transform_indices = @transform_4, window_bounds = array<i64: 1, 1, 16>}, {transform_indices = @transform_5, window_bounds = array<i64: 1, 32, 16>}, {transform_indices = @transform_6, window_bounds = array<i64: 1, 1, 16>}, {transform_indices = @transform_7, window_bounds = array<i64: 1, 32, 16>}, {transform_indices = @transform_8, window_bounds = array<i64: 1, 1, 16>}, {transform_indices = @transform_9, window_bounds = array<i64: 1, 64, 128>}, {transform_indices = @transform_10, window_bounds = array<i64: 1, 64, 16>}]} {
    %c0_i32 = arith.constant 0 : i32
    %0 = arith.cmpi eq, %arg1, %c0_i32 : i32
    %1 = arith.extui %0 : i1 to i32
    %c0_i32_0 = arith.constant 0 : i32
    %2 = arith.cmpi ne, %1, %c0_i32_0 : i32
    scf.if %2 {
      %c0_33 = arith.constant 0 : index
      %c0_34 = arith.constant 0 : index
      %46 = vector.load %arg2[%c0_33, %c0_34] : memref<64x32xbf16, #tpu.memory_space<vmem>>, vector<64x32xbf16>
      %c0_35 = arith.constant 0 : index
      %c0_36 = arith.constant 0 : index
      %c0_37 = arith.constant 0 : index
      %47 = vector.load %arg5[%c0_35, %c0_36, %c0_37] : memref<1x32x16xbf16, #tpu.memory_space<vmem>>, vector<1x32x16xbf16>
      %48 = vector.shape_cast %47 : vector<1x32x16xbf16> to vector<32x16xbf16>
      %cst_38 = arith.constant dense<0.000000e+00> : vector<64x16xf32>
      %49 = tpu.matmul %46, %48, %cst_38 {dimension_numbers = #tpu.dot_dimension_numbers<[1], [0], [0], [1], [0, 0, 1, 1], [], []>} : vector<64x32xbf16>, vector<32x16xbf16>, vector<64x16xf32> -> vector<64x16xf32>
      %c0_39 = arith.constant 0 : index
      %c0_40 = arith.constant 0 : index
      %c0_41 = arith.constant 0 : index
      %50 = vector.load %arg6[%c0_39, %c0_40, %c0_41] : memref<1x1x16xf32, #tpu.memory_space<vmem>>, vector<1x1x16xf32>
      %51 = vector.shape_cast %50 : vector<1x1x16xf32> to vector<1x16xf32>
      %52 = vector.broadcast %51 : vector<1x16xf32> to vector<64x16xf32>
      %53 = arith.addf %49, %52 : vector<64x16xf32>
      %54 = arith.truncf %53 : vector<64x16xf32> to vector<64x16xbf16>
      %c0_42 = arith.constant 0 : index
      %c0_43 = arith.constant 0 : index
      %55 = vector.load %arg13[%c0_42, %c0_43] : memref<64x16xbf16, #tpu.memory_space<vmem>>, vector<64x16xbf16>
      tpu.vector_store %arg13[%c0_42, %c0_43], %54 {strides = array<i32>} : memref<64x16xbf16, #tpu.memory_space<vmem>>, vector<64x16xbf16>,
      %cst_44 = arith.constant 0.000000e+00 : f32
      %56 = vector.broadcast %cst_44 : f32 to vector<64x16xf32>
      %c0_45 = arith.constant 0 : index
      %c0_46 = arith.constant 0 : index
      %c0_47 = arith.constant 0 : index
      %57 = vector.load %arg12[%c0_45, %c0_46, %c0_47] : memref<1x64x16xf32, #tpu.memory_space<vmem>>, vector<1x64x16xf32>
      %58 = vector.shape_cast %57 : vector<1x64x16xf32> to vector<64x16xf32>
      %59 = vector.shape_cast %56 : vector<64x16xf32> to vector<1x64x16xf32>
      tpu.vector_store %arg12[%c0_45, %c0_46, %c0_47], %59 {strides = array<i32>} : memref<1x64x16xf32, #tpu.memory_space<vmem>>, vector<1x64x16xf32>,
    } else {
    }
    %c0 = arith.constant 0 : index
    %c0_1 = arith.constant 0 : index
    %3 = vector.load %arg3[%c0, %c0_1] : memref<128x32xbf16, #tpu.memory_space<vmem>>, vector<128x32xbf16>
    %c0_2 = arith.constant 0 : index
    %c0_3 = arith.constant 0 : index
    %c0_4 = arith.constant 0 : index
    %4 = vector.load %arg7[%c0_2, %c0_3, %c0_4] : memref<1x32x16xbf16, #tpu.memory_space<vmem>>, vector<1x32x16xbf16>
    %5 = vector.shape_cast %4 : vector<1x32x16xbf16> to vector<32x16xbf16>
    %cst = arith.constant dense<0.000000e+00> : vector<128x16xf32>
    %6 = tpu.matmul %3, %5, %cst {dimension_numbers = #tpu.dot_dimension_numbers<[1], [0], [0], [1], [0, 0, 1, 1], [], []>} : vector<128x32xbf16>, vector<32x16xbf16>, vector<128x16xf32> -> vector<128x16xf32>
    %c0_5 = arith.constant 0 : index
    %c0_6 = arith.constant 0 : index
    %c0_7 = arith.constant 0 : index
    %7 = vector.load %arg8[%c0_5, %c0_6, %c0_7] : memref<1x1x16xf32, #tpu.memory_space<vmem>>, vector<1x1x16xf32>
    %8 = vector.shape_cast %7 : vector<1x1x16xf32> to vector<1x16xf32>
    %9 = vector.broadcast %8 : vector<1x16xf32> to vector<128x16xf32>
    %10 = arith.addf %6, %9 : vector<128x16xf32>
    %11 = arith.truncf %10 : vector<128x16xf32> to vector<128x16xbf16>
    %c0_8 = arith.constant 0 : index
    %c0_9 = arith.constant 0 : index
    %12 = vector.load %arg4[%c0_8, %c0_9] : memref<128x32xbf16, #tpu.memory_space<vmem>>, vector<128x32xbf16>
    %c0_10 = arith.constant 0 : index
    %c0_11 = arith.constant 0 : index
    %c0_12 = arith.constant 0 : index
    %13 = vector.load %arg9[%c0_10, %c0_11, %c0_12] : memref<1x32x16xbf16, #tpu.memory_space<vmem>>, vector<1x32x16xbf16>
    %14 = vector.shape_cast %13 : vector<1x32x16xbf16> to vector<32x16xbf16>
    %cst_13 = arith.constant dense<0.000000e+00> : vector<128x16xf32>
    %15 = tpu.matmul %12, %14, %cst_13 {dimension_numbers = #tpu.dot_dimension_numbers<[1], [0], [0], [1], [0, 0, 1, 1], [], []>} : vector<128x32xbf16>, vector<32x16xbf16>, vector<128x16xf32> -> vector<128x16xf32>
    %c0_14 = arith.constant 0 : index
    %c0_15 = arith.constant 0 : index
    %c0_16 = arith.constant 0 : index
    %16 = vector.load %arg10[%c0_14, %c0_15, %c0_16] : memref<1x1x16xf32, #tpu.memory_space<vmem>>, vector<1x1x16xf32>
    %17 = vector.shape_cast %16 : vector<1x1x16xf32> to vector<1x16xf32>
    %18 = vector.broadcast %17 : vector<1x16xf32> to vector<128x16xf32>
    %19 = arith.addf %15, %18 : vector<128x16xf32>
    %20 = arith.truncf %19 : vector<128x16xf32> to vector<128x16xbf16>
    %c0_17 = arith.constant 0 : index
    %c0_18 = arith.constant 0 : index
    %21 = vector.load %arg13[%c0_17, %c0_18] : memref<64x16xbf16, #tpu.memory_space<vmem>>, vector<64x16xbf16>
    %cst_19 = arith.constant dense<0.000000e+00> : vector<64x128xf32>
    %22 = tpu.matmul %21, %11, %cst_19 {dimension_numbers = #tpu.dot_dimension_numbers<[1], [1], [0], [0], [0, 0, 1, 0], [], []>} : vector<64x16xbf16>, vector<128x16xbf16>, vector<64x128xf32> -> vector<64x128xf32>
    %cst_20 = arith.constant 2.500000e-01 : f32
    %23 = vector.broadcast %cst_20 : f32 to vector<64x128xf32>
    %24 = arith.mulf %22, %23 : vector<64x128xf32>
    %cst_21 = arith.constant dense<0xFF800000> : vector<128xf32>
    %25 = vector.multi_reduction <maximumf>, %24, %cst_21 [0] : vector<64x128xf32> to vector<128xf32>
    %26 = vector.shape_cast %25 : vector<128xf32> to vector<1x128xf32>
    %27 = vector.broadcast %26 : vector<1x128xf32> to vector<64x128xf32>
    %28 = arith.subf %24, %27 : vector<64x128xf32>
    %29 = math.exp %28 : vector<64x128xf32>
    %cst_22 = arith.constant dense<0.000000e+00> : vector<128xf32>
    %30 = vector.multi_reduction <add>, %29, %cst_22 [0] : vector<64x128xf32> to vector<128xf32>
    %31 = vector.shape_cast %30 : vector<128xf32> to vector<1x128xf32>
    %32 = tpu.reciprocal %31 {approx = true} : vector<1x128xf32> -> vector<1x128xf32>
    %33 = vector.broadcast %32 : vector<1x128xf32> to vector<64x128xf32>
    %34 = arith.mulf %29, %33 : vector<64x128xf32>
    %c0_23 = arith.constant 0 : index
    %c0_24 = arith.constant 0 : index
    %c0_25 = arith.constant 0 : index
    %35 = vector.load %arg11[%c0_23, %c0_24, %c0_25] : memref<1x64x128xf32, #tpu.memory_space<vmem>>, vector<1x64x128xf32>
    %36 = vector.shape_cast %35 : vector<1x64x128xf32> to vector<64x128xf32>
    %37 = vector.shape_cast %34 : vector<64x128xf32> to vector<1x64x128xf32>
    tpu.vector_store %arg11[%c0_23, %c0_24, %c0_25], %37 {strides = array<i32>} : memref<1x64x128xf32, #tpu.memory_space<vmem>>, vector<1x64x128xf32>,
    %c0_26 = arith.constant 0 : index
    %c0_27 = arith.constant 0 : index
    %c0_28 = arith.constant 0 : index
    %38 = vector.load %arg12[%c0_26, %c0_27, %c0_28] : memref<1x64x16xf32, #tpu.memory_space<vmem>>, vector<1x64x16xf32>
    %39 = vector.shape_cast %38 : vector<1x64x16xf32> to vector<64x16xf32>
    %40 = arith.truncf %34 : vector<64x128xf32> to vector<64x128xbf16>
    %cst_29 = arith.constant dense<0.000000e+00> : vector<64x16xf32>
    %41 = tpu.matmul %40, %20, %cst_29 {dimension_numbers = #tpu.dot_dimension_numbers<[1], [0], [0], [1], [0, 0, 1, 1], [], []>} : vector<64x128xbf16>, vector<128x16xbf16>, vector<64x16xf32> -> vector<64x16xf32>
    %42 = arith.addf %39, %41 : vector<64x16xf32>
    %c0_30 = arith.constant 0 : index
    %c0_31 = arith.constant 0 : index
    %c0_32 = arith.constant 0 : index
    %43 = vector.load %arg12[%c0_30, %c0_31, %c0_32] : memref<1x64x16xf32, #tpu.memory_space<vmem>>, vector<1x64x16xf32>
    %44 = vector.shape_cast %43 : vector<1x64x16xf32> to vector<64x16xf32>
    %45 = vector.shape_cast %42 : vector<64x16xf32> to vector<1x64x16xf32>
    tpu.vector_store %arg12[%c0_30, %c0_31, %c0_32], %45 {strides = array<i32>} : memref<1x64x16xf32, #tpu.memory_space<vmem>>, vector<1x64x16xf32>,
    return
  }
  func.func @transform_0(%arg0: i32, %arg1: i32) -> (i32, i32) {
    %c0_i32 = arith.constant 0 : i32
    %c0_i32_0 = arith.constant 0 : i32
    %c0_i32_1 = arith.constant 0 : i32
    return %c0_i32, %c0_i32_0 : i32, i32
  }
  func.func @transform_1(%arg0: i32, %arg1: i32) -> (i32, i32) {
    %c0_i32 = arith.constant 0 : i32
    %c0_i32_0 = arith.constant 0 : i32
    return %arg1, %c0_i32 : i32, i32
  }
  func.func @transform_2(%arg0: i32, %arg1: i32) -> (i32, i32) {
    %c0_i32 = arith.constant 0 : i32
    %c0_i32_0 = arith.constant 0 : i32
    return %arg1, %c0_i32 : i32, i32
  }
  func.func @transform_3(%arg0: i32, %arg1: i32) -> (i32, i32, i32) {
    %c0_i32 = arith.constant 0 : i32
    %c0_i32_0 = arith.constant 0 : i32
    %c0_i32_1 = arith.constant 0 : i32
    return %arg0, %c0_i32, %c0_i32_0 : i32, i32, i32
  }
  func.func @transform_4(%arg0: i32, %arg1: i32) -> (i32, i32, i32) {
    %c0_i32 = arith.constant 0 : i32
    %c0_i32_0 = arith.constant 0 : i32
    %c0_i32_1 = arith.constant 0 : i32
    return %arg0, %c0_i32, %c0_i32_0 : i32, i32, i32
  }
  func.func @transform_5(%arg0: i32, %arg1: i32) -> (i32, i32, i32) {
    %c0_i32 = arith.constant 0 : i32
    %c0_i32_0 = arith.constant 0 : i32
    %c0_i32_1 = arith.constant 0 : i32
    return %arg0, %c0_i32, %c0_i32_0 : i32, i32, i32
  }
  func.func @transform_6(%arg0: i32, %arg1: i32) -> (i32, i32, i32) {
    %c0_i32 = arith.constant 0 : i32
    %c0_i32_0 = arith.constant 0 : i32
    %c0_i32_1 = arith.constant 0 : i32
    return %arg0, %c0_i32, %c0_i32_0 : i32, i32, i32
  }
  func.func @transform_7(%arg0: i32, %arg1: i32) -> (i32, i32, i32) {
    %c0_i32 = arith.constant 0 : i32
    %c0_i32_0 = arith.constant 0 : i32
    %c0_i32_1 = arith.constant 0 : i32
    return %arg0, %c0_i32, %c0_i32_0 : i32, i32, i32
  }
  func.func @transform_8(%arg0: i32, %arg1: i32) -> (i32, i32, i32) {
    %c0_i32 = arith.constant 0 : i32
    %c0_i32_0 = arith.constant 0 : i32
    %c0_i32_1 = arith.constant 0 : i32
    return %arg0, %c0_i32, %c0_i32_0 : i32, i32, i32
  }
  func.func @transform_9(%arg0: i32, %arg1: i32) -> (i32, i32, i32) {
    %c0_i32 = arith.constant 0 : i32
    %c0_i32_0 = arith.constant 0 : i32
    return %arg0, %c0_i32, %arg1 : i32, i32, i32
  }
  func.func @transform_10(%arg0: i32, %arg1: i32) -> (i32, i32, i32) {
    %c0_i32 = arith.constant 0 : i32
    %c0_i32_0 = arith.constant 0 : i32
    %c0_i32_1 = arith.constant 0 : i32
    return %arg0, %c0_i32, %c0_i32_0 : i32, i32, i32
  }
}

</mosaic_0001>

<llo_original>
// kernel: tpu_custom_call.1
$region0: #{tpu_custom_call.1}
  #allocation0 [shape = 'u32[]', space=smem, size = 0x4, offset = 0x4, fixed_abs, tag = 'smem constant byte address 0x4 - core index']
  #allocation1 [shape = 'u32[144,128]{1,0:T(1,128)}', space=vmem, size = 0x12000, scoped, tag = 'internal scratch']
  #allocation2 [shape = 'bf16[64,16]{1,0:T(16,128)(2,1)}', space=vmem, size = 0x4000, scoped, tag = 'scratch operand']
  %s0 = inlined_call_operand.vmem [shape: bf16[64,32], index: 0, kind: input, shape index: {}]
  %s1 = inlined_call_operand.vmem [shape: bf16[256,32], index: 1, kind: input, shape index: {}]
  %s2 = inlined_call_operand.vmem [shape: bf16[256,32], index: 2, kind: input, shape index: {}]
  %s3 = inlined_call_operand.vmem [shape: bf16[4,32,16], index: 3, kind: input, shape index: {}]
  %s4 = inlined_call_operand.vmem [shape: f32[4,1,16], index: 4, kind: input, shape index: {}]
  %s5 = inlined_call_operand.vmem [shape: bf16[4,32,16], index: 5, kind: input, shape index: {}]
  %s6 = inlined_call_operand.vmem [shape: f32[4,1,16], index: 6, kind: input, shape index: {}]
  %s7 = inlined_call_operand.vmem [shape: bf16[4,32,16], index: 7, kind: input, shape index: {}]
  %s8 = inlined_call_operand.vmem [shape: f32[4,1,16], index: 8, kind: input, shape index: {}]
  %s9 = inlined_call_operand.hbm [shape: f32[4,64,256], index: 9, kind: output, shape index: {0}]
  %s10 = inlined_call_operand.vmem [shape: f32[4,64,16], index: 10, kind: output, shape index: {1}]
  %11 = xla_tuple %s9, %s10
  %s12 = sld [smem:[#allocation0]]
  $region81: #{tpu_custom_call.1} parent=0
    _
  %s14 = ssub.s32 1, %s12
  %s15 = scalar_select 0, %s14, %s12
  $region1: #{tpu_custom_call.1} parent=0
    #allocation3 [shape = 'u8[65536]{0}', space=vmem, size = 0x10000, scoped, tag = 'output window, operand 0']
    #allocation4 [shape = 's32[2]{0}', space=sflag, size = 0x8, scoped, tag = 'scoped memory for tpu_custom_call.1']
    %16 = vsyncpa [#allocation4], 0
    %s17 = scalar_lea.sflag [#allocation4], 1
    %18 = vsyncpa %s17, 0
    loop: start=0, step=1, limit=10
    $region2: #{tpu_custom_call.1} parent=1 // loop_pre_header
      _
    $region3: #{tpu_custom_call.1} parent=1 // loop_header
      %s20 = sphi 0, %s24
      %p21 = scmp.ge.s32.totalorder %s20, 10
      %s27 = sphi 0, %s39
      %s28 = sphi 0, %s35
      %s29 = sphi 0, %s27
      %s30 = sphi 0, %s28
      %s31 = sphi 0, %s29
      %s32 = sphi 0, %s30
      %s40 = sphi 0, %s40
      %s42 = sphi 0, %s40
      %s43 = sphi 0, %s42
      %s57 = sphi 0, %s43
      %s63 = sphi 0, %s65
      %s66 = sphi 0, %s63
      %s67 = sphi 0, %s66
      %s83 = sphi 0, %s67
      %s89 = sphi 0, %s91
      %s92 = sphi 0, %s89
      %s93 = sphi 0, %s92
      %s109 = sphi 0, %s93
      %s115 = sphi 0, %s117
      %s118 = sphi 0, %s115
      %s119 = sphi 0, %s118
      %s135 = sphi 0, %s119
      %s141 = sphi 0, %s143
      %s144 = sphi 0, %s141
      %s145 = sphi 0, %s144
      %s161 = sphi 0, %s145
      %s167 = sphi 0, %s169
      %s170 = sphi 0, %s167
      %s171 = sphi 0, %s170
      %s187 = sphi 0, %s171
      %s193 = sphi 0, %s195
      %s196 = sphi 0, %s193
      %s197 = sphi 0, %s196
      %s213 = sphi 0, %s197
      %s219 = sphi 0, %s221
      %s222 = sphi 0, %s219
      %s223 = sphi 0, %s222
      %s239 = sphi 0, %s223
      %s245 = sphi 0, %s247
      %s248 = sphi 0, %s245
      %s249 = sphi 0, %s248
      %s265 = sphi 0, %s249
      %s273 = sphi 0, %s275
      %s276 = sphi 0, %s273
      %s277 = sphi 0, %s276
      %s293 = sphi 0, %s277
      %s299 = sphi 0, %s301
      %s302 = sphi 0, %s299
      %s303 = sphi 0, %s302
      %s319 = sphi 0, %s303
    $region4: #{tpu_custom_call.1} parent=1 // loop_header_branch
      %23 = sbr.rel (%p21) target = $region8
    $region5: #{tpu_custom_call.1} parent=1 // loop_body
      %s25 = ssub.s32 %s20, 1
      %s26 = ssub.s32 %s20, 2
      %s33 = sadd.s32 1, %s28
      %p34 = scmp.ge.s32.totalorder %s33, 2
      %s35 = scalar_select %p34, 0, %s33
      %s36 = sadd.s32 1, %s27
      %s37 = scalar_select %p34, %s36, %s27
      %p38 = scmp.ge.s32.totalorder %s37, 4
      %s39 = scalar_select %p38, 0, %s37
      %s41 = sadd.s32 %s40, 1
      %p44 = scmp.eq.s32.totalorder %s20, 7
      %p45 = scmp.ne.s32.totalorder %s40, %s42
      %p46 = scmp.eq.s32.totalorder %s20, 0
      %p47 = por %p45, %p46
      %p48 = scmp.ne.s32.totalorder %s40, %s42
      %p49 = scmp.eq.s32.totalorder %s25, 7
      %p50 = por %p48, %p49
      %p51 = scmp.ne.s32.totalorder %s42, %s43
      %p52 = scmp.eq.s32.totalorder %s25, 0
      %p53 = por %p51, %p52
      %p54 = scmp.ne.s32.totalorder %s42, %s43
      %p55 = scmp.eq.s32.totalorder %s26, 7
      %p56 = por %p54, %p55
      %p58 = scmp.ne.s32.totalorder %s43, %s57
      %p59 = scmp.eq.s32.totalorder %s26, 0
      %p60 = por %p58, %p59
      %s61 = ssub.s32 %s28, %s35
      %p62 = scmp.eq.s32.totalorder %s61, 0
      %s64 = sadd.s32 %s63, 1
      %s65 = scalar_select %p62, %s63, %s64
      %p68 = pneg %p62
      %p69 = scmp.eq.s32.totalorder %s20, 7
      %p70 = por %p68, %p69
      %p71 = scmp.ne.s32.totalorder %s63, %s66
      %p72 = scmp.eq.s32.totalorder %s20, 0
      %p73 = por %p71, %p72
      %p74 = scmp.ne.s32.totalorder %s63, %s66
      %p75 = scmp.eq.s32.totalorder %s25, 7
      %p76 = por %p74, %p75
      %p77 = scmp.ne.s32.totalorder %s66, %s67
      %p78 = scmp.eq.s32.totalorder %s25, 0
      %p79 = por %p77, %p78
      %p80 = scmp.ne.s32.totalorder %s66, %s67
      %p81 = scmp.eq.s32.totalorder %s26, 7
      %p82 = por %p80, %p81
      %p84 = scmp.ne.s32.totalorder %s67, %s83
      %p85 = scmp.eq.s32.totalorder %s26, 0
      %p86 = por %p84, %p85
      %s87 = ssub.s32 %s28, %s35
      %p88 = scmp.eq.s32.totalorder %s87, 0
      %s90 = sadd.s32 %s89, 1
      %s91 = scalar_select %p88, %s89, %s90
      %p94 = pneg %p88
      %p95 = scmp.eq.s32.totalorder %s20, 7
      %p96 = por %p94, %p95
      %p97 = scmp.ne.s32.totalorder %s89, %s92
      %p98 = scmp.eq.s32.totalorder %s20, 0
      %p99 = por %p97, %p98
      %p100 = scmp.ne.s32.totalorder %s89, %s92
      %p101 = scmp.eq.s32.totalorder %s25, 7
      %p102 = por %p100, %p101
      %p103 = scmp.ne.s32.totalorder %s92, %s93
      %p104 = scmp.eq.s32.totalorder %s25, 0
      %p105 = por %p103, %p104
      %p106 = scmp.ne.s32.totalorder %s92, %s93
      %p107 = scmp.eq.s32.totalorder %s26, 7
      %p108 = por %p106, %p107
      %p110 = scmp.ne.s32.totalorder %s93, %s109
      %p111 = scmp.eq.s32.totalorder %s26, 0
      %p112 = por %p110, %p111
      %s113 = ssub.s32 %s27, %s39
      %p114 = scmp.eq.s32.totalorder %s113, 0
      %s116 = sadd.s32 %s115, 1
      %s117 = scalar_select %p114, %s115, %s116
      %p120 = pneg %p114
      %p121 = scmp.eq.s32.totalorder %s20, 7
      %p122 = por %p120, %p121
      %p123 = scmp.ne.s32.totalorder %s115, %s118
      %p124 = scmp.eq.s32.totalorder %s20, 0
      %p125 = por %p123, %p124
      %p126 = scmp.ne.s32.totalorder %s115, %s118
      %p127 = scmp.eq.s32.totalorder %s25, 7
      %p128 = por %p126, %p127
      %p129 = scmp.ne.s32.totalorder %s118, %s119
      %p130 = scmp.eq.s32.totalorder %s25, 0
      %p131 = por %p129, %p130
      %p132 = scmp.ne.s32.totalorder %s118, %s119
      %p133 = scmp.eq.s32.totalorder %s26, 7
      %p134 = por %p132, %p133
      %p136 = scmp.ne.s32.totalorder %s119, %s135
      %p137 = scmp.eq.s32.totalorder %s26, 0
      %p138 = por %p136, %p137
      %s139 = ssub.s32 %s27, %s39
      %p140 = scmp.eq.s32.totalorder %s139, 0
      %s142 = sadd.s32 %s141, 1
      %s143 = scalar_select %p140, %s141, %s142
      %p146 = pneg %p140
      %p147 = scmp.eq.s32.totalorder %s20, 7
      %p148 = por %p146, %p147
      %p149 = scmp.ne.s32.totalorder %s141, %s144
      %p150 = scmp.eq.s32.totalorder %s20, 0
      %p151 = por %p149, %p150
      %p152 = scmp.ne.s32.totalorder %s141, %s144
      %p153 = scmp.eq.s32.totalorder %s25, 7
      %p154 = por %p152, %p153
      %p155 = scmp.ne.s32.totalorder %s144, %s145
      %p156 = scmp.eq.s32.totalorder %s25, 0
      %p157 = por %p155, %p156
      %p158 = scmp.ne.s32.totalorder %s144, %s145
      %p159 = scmp.eq.s32.totalorder %s26, 7
      %p160 = por %p158, %p159
      %p162 = scmp.ne.s32.totalorder %s145, %s161
      %p163 = scmp.eq.s32.totalorder %s26, 0
      %p164 = por %p162, %p163
      %s165 = ssub.s32 %s27, %s39
      %p166 = scmp.eq.s32.totalorder %s165, 0
      %s168 = sadd.s32 %s167, 1
      %s169 = scalar_select %p166, %s167, %s168
      %p172 = pneg %p166
      %p173 = scmp.eq.s32.totalorder %s20, 7
      %p174 = por %p172, %p173
      %p175 = scmp.ne.s32.totalorder %s167, %s170
      %p176 = scmp.eq.s32.totalorder %s20, 0
      %p177 = por %p175, %p176
      %p178 = scmp.ne.s32.totalorder %s167, %s170
      %p179 = scmp.eq.s32.totalorder %s25, 7
      %p180 = por %p178, %p179
      %p181 = scmp.ne.s32.totalorder %s170, %s171
      %p182 = scmp.eq.s32.totalorder %s25, 0
      %p183 = por %p181, %p182
      %p184 = scmp.ne.s32.totalorder %s170, %s171
      %p185 = scmp.eq.s32.totalorder %s26, 7
      %p186 = por %p184, %p185
      %p188 = scmp.ne.s32.totalorder %s171, %s187
      %p189 = scmp.eq.s32.totalorder %s26, 0
      %p190 = por %p188, %p189
      %s191 = ssub.s32 %s27, %s39
      %p192 = scmp.eq.s32.totalorder %s191, 0
      %s194 = sadd.s32 %s193, 1
      %s195 = scalar_select %p192, %s193, %s194
      %p198 = pneg %p192
      %p199 = scmp.eq.s32.totalorder %s20, 7
      %p200 = por %p198, %p199
      %p201 = scmp.ne.s32.totalorder %s193, %s196
      %p202 = scmp.eq.s32.totalorder %s20, 0
      %p203 = por %p201, %p202
      %p204 = scmp.ne.s32.totalorder %s193, %s196
      %p205 = scmp.eq.s32.totalorder %s25, 7
      %p206 = por %p204, %p205
      %p207 = scmp.ne.s32.totalorder %s196, %s197
      %p208 = scmp.eq.s32.totalorder %s25, 0
      %p209 = por %p207, %p208
      %p210 = scmp.ne.s32.totalorder %s196, %s197
      %p211 = scmp.eq.s32.totalorder %s26, 7
      %p212 = por %p210, %p211
      %p214 = scmp.ne.s32.totalorder %s197, %s213
      %p215 = scmp.eq.s32.totalorder %s26, 0
      %p216 = por %p214, %p215
      %s217 = ssub.s32 %s27, %s39
      %p218 = scmp.eq.s32.totalorder %s217, 0
      %s220 = sadd.s32 %s219, 1
      %s221 = scalar_select %p218, %s219, %s220
      %p224 = pneg %p218
      %p225 = scmp.eq.s32.totalorder %s20, 7
      %p226 = por %p224, %p225
      %p227 = scmp.ne.s32.totalorder %s219, %s222
      %p228 = scmp.eq.s32.totalorder %s20, 0
      %p229 = por %p227, %p228
      %p230 = scmp.ne.s32.totalorder %s219, %s222
      %p231 = scmp.eq.s32.totalorder %s25, 7
      %p232 = por %p230, %p231
      %p233 = scmp.ne.s32.totalorder %s222, %s223
      %p234 = scmp.eq.s32.totalorder %s25, 0
      %p235 = por %p233, %p234
      %p236 = scmp.ne.s32.totalorder %s222, %s223
      %p237 = scmp.eq.s32.totalorder %s26, 7
      %p238 = por %p236, %p237
      %p240 = scmp.ne.s32.totalorder %s223, %s239
      %p241 = scmp.eq.s32.totalorder %s26, 0
      %p242 = por %p240, %p241
      %s243 = ssub.s32 %s27, %s39
      %p244 = scmp.eq.s32.totalorder %s243, 0
      %s246 = sadd.s32 %s245, 1
      %s247 = scalar_select %p244, %s245, %s246
      %p250 = pneg %p244
      %p251 = scmp.eq.s32.totalorder %s20, 7
      %p252 = por %p250, %p251
      %p253 = scmp.ne.s32.totalorder %s245, %s248
      %p254 = scmp.eq.s32.totalorder %s20, 0
      %p255 = por %p253, %p254
      %p256 = scmp.ne.s32.totalorder %s245, %s248
      %p257 = scmp.eq.s32.totalorder %s25, 7
      %p258 = por %p256, %p257
      %p259 = scmp.ne.s32.totalorder %s248, %s249
      %p260 = scmp.eq.s32.totalorder %s25, 0
      %p261 = por %p259, %p260
      %p262 = scmp.ne.s32.totalorder %s248, %s249
      %p263 = scmp.eq.s32.totalorder %s26, 7
      %p264 = por %p262, %p263
      %p266 = scmp.ne.s32.totalorder %s249, %s265
      %p267 = scmp.eq.s32.totalorder %s26, 0
      %p268 = por %p266, %p267
      %s269 = ssub.s32 %s27, %s39
      %s270 = ssub.s32 %s28, %s35
      %s271 = sor.u32 %s269, %s270
      %p272 = scmp.eq.s32.totalorder %s271, 0
      %s274 = sadd.s32 %s273, 1
      %s275 = scalar_select %p272, %s273, %s274
      %p278 = pneg %p272
      %p279 = scmp.eq.s32.totalorder %s20, 7
      %p280 = por %p278, %p279
      %p281 = scmp.ne.s32.totalorder %s273, %s276
      %p282 = scmp.eq.s32.totalorder %s20, 0
      %p283 = por %p281, %p282
      %p284 = scmp.ne.s32.totalorder %s273, %s276
      %p285 = scmp.eq.s32.totalorder %s25, 7
      %p286 = por %p284, %p285
      %p287 = scmp.ne.s32.totalorder %s276, %s277
      %p288 = scmp.eq.s32.totalorder %s25, 0
      %p289 = por %p287, %p288
      %p290 = scmp.ne.s32.totalorder %s276, %s277
      %p291 = scmp.eq.s32.totalorder %s26, 7
      %p292 = por %p290, %p291
      %p294 = scmp.ne.s32.totalorder %s277, %s293
      %p295 = scmp.eq.s32.totalorder %s26, 0
      %p296 = por %p294, %p295
      %s297 = ssub.s32 %s27, %s39
      %p298 = scmp.eq.s32.totalorder %s297, 0
      %s300 = sadd.s32 %s299, 1
      %s301 = scalar_select %p298, %s299, %s300
      %p304 = pneg %p298
      %p305 = scmp.eq.s32.totalorder %s20, 7
      %p306 = por %p304, %p305
      %p307 = scmp.ne.s32.totalorder %s299, %s302
      %p308 = scmp.eq.s32.totalorder %s20, 0
      %p309 = por %p307, %p308
      %p310 = scmp.ne.s32.totalorder %s299, %s302
      %p311 = scmp.eq.s32.totalorder %s25, 7
      %p312 = por %p310, %p311
      %p313 = scmp.ne.s32.totalorder %s302, %s303
      %p314 = scmp.eq.s32.totalorder %s25, 0
      %p315 = por %p313, %p314
      %p316 = scmp.ne.s32.totalorder %s302, %s303
      %p317 = scmp.eq.s32.totalorder %s26, 7
      %p318 = por %p316, %p317
      %p320 = scmp.ne.s32.totalorder %s303, %s319
      %p321 = scmp.eq.s32.totalorder %s26, 0
      %p322 = por %p320, %p321
      %p323 = scmp.le.s32.totalorder 1, %s20
      %p324 = scmp.lt.s32.totalorder %s20, 9
      %p325 = pnand %p323, %p324
      %p326 = pneg %p325
      // Predicated region
      $region9: #{tpu_custom_call.1} parent=5 // pred_check
        _
      $region10: #{tpu_custom_call.1} parent=5 // pred_check_branch
        %328 = sbr.rel (%p325) target = $region12
      $region11: #{tpu_custom_call.1} parent=5 // pred_region
        %s329 = ssub.s32 %s20, 1
        // Predicated region
        $region13: #{tpu_custom_call.1} parent=11 // pred_check
          %p330 = pneg %p53
        $region14: #{tpu_custom_call.1} parent=11 // pred_check_branch
          %332 = sbr.rel (%p330) target = $region16
        $region15: #{tpu_custom_call.1} parent=11 // pred_region
          _
        $region16: #{tpu_custom_call.1} parent=11 // pred_fallthru
          _
      $region12: #{tpu_custom_call.1} parent=5 // pred_fallthru
        _
      %p333 = scmp.lt.s32.totalorder %s20, 8
      // Predicated region
      $region17: #{tpu_custom_call.1} parent=5 // pred_check
        %p334 = pneg %p333
      $region18: #{tpu_custom_call.1} parent=5 // pred_check_branch
        %336 = sbr.rel (%p334) target = $region20
      $region19: #{tpu_custom_call.1} parent=5 // pred_region
        // Predicated region
        $region21: #{tpu_custom_call.1} parent=19 // pred_check
          %p337 = pneg %p73
        $region22: #{tpu_custom_call.1} parent=19 // pred_check_branch
          %339 = sbr.rel (%p337) target = $region24
        $region23: #{tpu_custom_call.1} parent=19 // pred_region
          %s340 = smul.u32 16, %s28
          %p341 = scmp.lt.s32.totalorder %s340, 31
          %s342 = scalar_select %p341, %s340, 31
          %s343 = smul.addr %s342, 4
          %s344 = scalar_lea.vmem %s1, %s343
          %s345 = smul.u32 16, %s28
        $region24: #{tpu_custom_call.1} parent=19 // pred_fallthru
          _
        // Predicated region
        $region25: #{tpu_custom_call.1} parent=19 // pred_check
          %p346 = pneg %p99
        $region26: #{tpu_custom_call.1} parent=19 // pred_check_branch
          %348 = sbr.rel (%p346) target = $region28
        $region27: #{tpu_custom_call.1} parent=19 // pred_region
          %s349 = smul.u32 16, %s28
          %p350 = scmp.lt.s32.totalorder %s349, 31
          %s351 = scalar_select %p350, %s349, 31
          %s352 = smul.addr %s351, 4
          %s353 = scalar_lea.vmem %s2, %s352
          %s354 = smul.u32 16, %s28
        $region28: #{tpu_custom_call.1} parent=19 // pred_fallthru
          _
        // Predicated region
        $region29: #{tpu_custom_call.1} parent=19 // pred_check
          %p355 = pneg %p125
        $region30: #{tpu_custom_call.1} parent=19 // pred_check_branch
          %357 = sbr.rel (%p355) target = $region32
        $region31: #{tpu_custom_call.1} parent=19 // pred_region
          %p358 = scmp.lt.s32.totalorder %s27, 3
          %s359 = scalar_select %p358, %s27, 3
          %s360 = smul.addr %s359, 4
          %s361 = smul.addr %s360, 4
          %s362 = scalar_lea.vmem %s3, %s361
        $region32: #{tpu_custom_call.1} parent=19 // pred_fallthru
          _
        // Predicated region
        $region33: #{tpu_custom_call.1} parent=19 // pred_check
          %p363 = pneg %p151
        $region34: #{tpu_custom_call.1} parent=19 // pred_check_branch
          %365 = sbr.rel (%p363) target = $region36
        $region35: #{tpu_custom_call.1} parent=19 // pred_region
          %p366 = scmp.lt.s32.totalorder %s27, 3
          %s367 = scalar_select %p366, %s27, 3
          %s368 = scalar_lea.vmem %s4, %s367
        $region36: #{tpu_custom_call.1} parent=19 // pred_fallthru
          _
        // Predicated region
        $region37: #{tpu_custom_call.1} parent=19 // pred_check
          %p369 = pneg %p177
        $region38: #{tpu_custom_call.1} parent=19 // pred_check_branch
          %371 = sbr.rel (%p369) target = $region40
        $region39: #{tpu_custom_call.1} parent=19 // pred_region
          %p372 = scmp.lt.s32.totalorder %s27, 3
          %s373 = scalar_select %p372, %s27, 3
          %s374 = smul.addr %s373, 4
          %s375 = smul.addr %s374, 4
          %s376 = scalar_lea.vmem %s5, %s375
        $region40: #{tpu_custom_call.1} parent=19 // pred_fallthru
          _
        // Predicated region
        $region41: #{tpu_custom_call.1} parent=19 // pred_check
          %p377 = pneg %p203
        $region42: #{tpu_custom_call.1} parent=19 // pred_check_branch
          %379 = sbr.rel (%p377) target = $region44
        $region43: #{tpu_custom_call.1} parent=19 // pred_region
          %p380 = scmp.lt.s32.totalorder %s27, 3
          %s381 = scalar_select %p380, %s27, 3
          %s382 = scalar_lea.vmem %s6, %s381
        $region44: #{tpu_custom_call.1} parent=19 // pred_fallthru
          _
        // Predicated region
        $region45: #{tpu_custom_call.1} parent=19 // pred_check
          %p383 = pneg %p229
        $region46: #{tpu_custom_call.1} parent=19 // pred_check_branch
          %385 = sbr.rel (%p383) target = $region48
        $region47: #{tpu_custom_call.1} parent=19 // pred_region
          %p386 = scmp.lt.s32.totalorder %s27, 3
          %s387 = scalar_select %p386, %s27, 3
          %s388 = smul.addr %s387, 4
          %s389 = smul.addr %s388, 4
          %s390 = scalar_lea.vmem %s7, %s389
        $region48: #{tpu_custom_call.1} parent=19 // pred_fallthru
          _
        // Predicated region
        $region49: #{tpu_custom_call.1} parent=19 // pred_check
          %p391 = pneg %p255
        $region50: #{tpu_custom_call.1} parent=19 // pred_check_branch
          %393 = sbr.rel (%p391) target = $region52
        $region51: #{tpu_custom_call.1} parent=19 // pred_region
          %p394 = scmp.lt.s32.totalorder %s27, 3
          %s395 = scalar_select %p394, %s27, 3
          %s396 = scalar_lea.vmem %s8, %s395
        $region52: #{tpu_custom_call.1} parent=19 // pred_fallthru
          _
      $region20: #{tpu_custom_call.1} parent=5 // pred_fallthru
        _
      %p397 = scmp.le.s32.totalorder 1, %s20
      %p398 = scmp.lt.s32.totalorder %s20, 9
      %p399 = pnand %p397, %p398
      %p400 = pneg %p399
      // Predicated region
      $region53: #{tpu_custom_call.1} parent=5 // pred_check
        _
      $region54: #{tpu_custom_call.1} parent=5 // pred_check_branch
        %402 = sbr.rel (%p399) target = $region56
      $region55: #{tpu_custom_call.1} parent=5 // pred_region
        %s403 = ssub.s32 %s20, 1
        %p404 = pneg %p53
        %p405 = pneg %p50
        %s406 = smul.u32 16, %s30
        %p407 = scmp.lt.s32.totalorder %s406, 31
        %s408 = scalar_select %p407, %s406, 31
        %s409 = smul.addr %s408, 4
        %s410 = scalar_lea.vmem %s1, %s409
        %p411 = pneg %p79
        %p412 = pneg %p76
        %s413 = smul.u32 16, %s30
        %p414 = scmp.lt.s32.totalorder %s413, 31
        %s415 = scalar_select %p414, %s413, 31
        %s416 = smul.addr %s415, 4
        %s417 = scalar_lea.vmem %s2, %s416
        %p418 = pneg %p105
        %p419 = pneg %p102
        %p420 = scmp.lt.s32.totalorder %s29, 3
        %s421 = scalar_select %p420, %s29, 3
        %s422 = smul.addr %s421, 4
        %s423 = smul.addr %s422, 4
        %s424 = scalar_lea.vmem %s3, %s423
        %p425 = pneg %p131
        %p426 = pneg %p128
        %p427 = scmp.lt.s32.totalorder %s29, 3
        %s428 = scalar_select %p427, %s29, 3
        %s429 = scalar_lea.vmem %s4, %s428
        %p430 = pneg %p157
        %p431 = pneg %p154
        %p432 = scmp.lt.s32.totalorder %s29, 3
        %s433 = scalar_select %p432, %s29, 3
        %s434 = smul.addr %s433, 4
        %s435 = smul.addr %s434, 4
        %s436 = scalar_lea.vmem %s5, %s435
        %p437 = pneg %p183
        %p438 = pneg %p180
        %p439 = scmp.lt.s32.totalorder %s29, 3
        %s440 = scalar_select %p439, %s29, 3
        %s441 = scalar_lea.vmem %s6, %s440
        %p442 = pneg %p209
        %p443 = pneg %p206
        %p444 = scmp.lt.s32.totalorder %s29, 3
        %s445 = scalar_select %p444, %s29, 3
        %s446 = smul.addr %s445, 4
        %s447 = smul.addr %s446, 4
        %s448 = scalar_lea.vmem %s7, %s447
        %p449 = pneg %p235
        %p450 = pneg %p232
        %p451 = scmp.lt.s32.totalorder %s29, 3
        %s452 = scalar_select %p451, %s29, 3
        %s453 = scalar_lea.vmem %s8, %s452
        %p454 = pneg %p261
        %p455 = pneg %p258
        %p456 = pneg %p289
        %p457 = pneg %p286
        %s458 = sand.u32 %s276, 1
        %s459 = scalar_lea.sflag [#allocation4], %s458
        %s460 = sand.u32 %s276, 1
        %s461 = smul.addr %s460, 64
        %s462 = scalar_lea.vmem [#allocation3], %s461
        %p463 = pneg %p315
        %p464 = pneg %p312
        %p465 = scmp.lt.s32.totalorder %s29, 3
        %s466 = scalar_select %p465, %s29, 3
        %s467 = smul.addr %s466, 8
        %s468 = smul.addr %s467, 8
        %s469 = scalar_lea.vmem %s10, %s468
        %s470 = smul.u32 16, %s30
        %p471 = scmp.lt.s32.totalorder %s470, 31
        %s472 = scalar_select %p471, %s470, 31
        %s473 = smul.addr %s472, 4
        %s474 = scalar_lea.vmem %s1, %s473
        %s475 = smul.u32 16, %s30
        %s476 = smul.u32 16, %s30
        %p477 = scmp.lt.s32.totalorder %s476, 31
        %s478 = scalar_select %p477, %s476, 31
        %s479 = smul.addr %s478, 4
        %s480 = scalar_lea.vmem %s2, %s479
        %s481 = smul.u32 16, %s30
        %p482 = scmp.lt.s32.totalorder %s29, 3
        %s483 = scalar_select %p482, %s29, 3
        %s484 = smul.addr %s483, 4
        %s485 = smul.addr %s484, 4
        %s486 = scalar_lea.vmem %s3, %s485
        %p487 = scmp.lt.s32.totalorder %s29, 3
        %s488 = scalar_select %p487, %s29, 3
        %s489 = scalar_lea.vmem %s4, %s488
        %p490 = scmp.lt.s32.totalorder %s29, 3
        %s491 = scalar_select %p490, %s29, 3
        %s492 = smul.addr %s491, 4
        %s493 = smul.addr %s492, 4
        %s494 = scalar_lea.vmem %s5, %s493
        %p495 = scmp.lt.s32.totalorder %s29, 3
        %s496 = scalar_select %p495, %s29, 3
        %s497 = scalar_lea.vmem %s6, %s496
        %p498 = scmp.lt.s32.totalorder %s29, 3
        %s499 = scalar_select %p498, %s29, 3
        %s500 = smul.addr %s499, 4
        %s501 = smul.addr %s500, 4
        %s502 = scalar_lea.vmem %s7, %s501
        %p503 = scmp.lt.s32.totalorder %s29, 3
        %s504 = scalar_select %p503, %s29, 3
        %s505 = scalar_lea.vmem %s8, %s504
        %p506 = scmp.lt.s32.totalorder %s29, 3
        %s507 = scalar_select %p506, %s29, 3
        %s508 = smul.addr %s507, 8
        %s509 = smul.addr %s508, 8
        %s510 = scalar_lea.vmem %s10, %s509
        %p512 = scmp.eq.s32.totalorder %s30, 0
        // Predicated region
        $region57: #{tpu_custom_call.1} parent=55 // pred_check
          %p513 = pneg %p512
        $region58: #{tpu_custom_call.1} parent=55 // pred_check_branch
          %515 = sbr.rel (%p513) target = $region60
        $region59: #{tpu_custom_call.1} parent=55 // pred_region
          %v516 = vld [vmem:[%s0] sm:$0xf]
          %v517 = vld [vmem:[%s0 + $0x4] sm:$0xf]
          %v518 = vld [vmem:[%s0 + $0x8] sm:$0xf]
          %v519 = vld [vmem:[%s0 + $0xc] sm:$0xf]
          %v520 = vld [vmem:[%s0 + $0x10] sm:$0xf]
          %v521 = vld [vmem:[%s0 + $0x14] sm:$0xf]
          %v522 = vld [vmem:[%s0 + $0x18] sm:$0xf]
          %v523 = vld [vmem:[%s0 + $0x1c] sm:$0xf]
          %v524 = vld [vmem:[%s486] sm:$0xf]
          %v525 = vld [vmem:[%s486 + $0x4] sm:$0xf]
          %v526 = vld [vmem:[%s486 + $0x8] sm:$0xf]
          %v527 = vld [vmem:[%s486 + $0xc] sm:$0xf]
          %v528 = vld [vmem:[%s489] sm:$0x1]
          %v530 = vlaneseq
          %v531 = vshrl.u32 %v530, 7
          %v532 = vsub.s32 0, %v531
          %v533 = vrot.slane %v528, %v532
          %v543 = vunpack.c.l.b16 %v516
          %v544 = vunpack.c.l.b16 %v517
          %v545 = vunpack.c.l.b16 %v518
          %v546 = vunpack.c.l.b16 %v519
          %v547 = vunpack.c.l.b16 %v520
          %v548 = vunpack.c.l.b16 %v521
          %v549 = vunpack.c.l.b16 %v522
          %v550 = vunpack.c.l.b16 %v523
          %v551 = vpack.c.b16 %v544, %v543
          %v552 = vpack.c.b16 %v546, %v545
          %v553 = vpack.c.b16 %v548, %v547
          %v554 = vpack.c.b16 %v550, %v549
          %v559 = vunpack.c.l.b16 %v524
          %v560 = vunpack.c.l.b16 %v525
          %v561 = vunpack.c.l.b16 %v526
          %v562 = vunpack.c.l.b16 %v527
          %v563 = vpack.c.b16 %v560, %v559
          %v564 = vpack.c.b16 %v562, %v561
          %vm567 = vcmask 261120
          %v569 = vsel %vm567, %v551, 0
          %v572 = vsel %vm567, %v552, 0
          %v575 = vsel %vm567, %v553, 0
          %v578 = vsel %vm567, %v554, 0
          %580 = vmatprep.subr.bf16.mxu0 0
          %581 = vmatpush1.bf16.msra.mxu0 %v563
          %582 = vmatprep.subr.bf16.mxu0 0
          %583 = vmatpush1.bf16.msra.mxu0 %v564
          %584 = vmatprep.subr.bf16.mxu0 0
          %585 = vmatpush1.bf16.msra.mxu0 0
          %586 = vmatprep.subr.bf16.mxu0 0
          %587 = vmatpush1.bf16.msra.mxu0 0
          %588 = vmatprep.subr.bf16.mxu0 0
          %589 = vmatpush1.bf16.msra.mxu0 0
          %590 = vmatprep.subr.bf16.mxu0 0
          %591 = vmatpush1.bf16.msra.mxu0 0
          %592 = vmatprep.subr.bf16.mxu0 0
          %593 = vmatpush1.bf16.msra.mxu0 0
          %594 = vmatprep.subr.bf16.mxu0 0
          %595 = vmatpush1.bf16.msra.mxu0 0
          %596 = vmatprep.subr.bf16.mxu0 0
          %597 = vmatpush1.bf16.msra.mxu0 0
          %598 = vmatprep.subr.bf16.mxu0 0
          %599 = vmatpush1.bf16.msra.mxu0 0
          %600 = vmatprep.subr.bf16.mxu0 0
          %601 = vmatpush1.bf16.msra.mxu0 0
          %602 = vmatprep.subr.bf16.mxu0 0
          %603 = vmatpush1.bf16.msra.mxu0 0
          %604 = vmatprep.subr.bf16.mxu0 0
          %605 = vmatpush1.bf16.msra.mxu0 0
          %606 = vmatprep.subr.bf16.mxu0 0
          %607 = vmatpush1.bf16.msra.mxu0 0
          %608 = vmatprep.subr.bf16.mxu0 0
          %609 = vmatpush1.bf16.msra.mxu0 0
          %610 = vmatprep.subr.bf16.mxu0 0
          %611 = vmatpush1.bf16.msra.mxu0 0
          %612 = vmatprep.mubr.bf16.mxu0 0
          %613 = vmatmul.mubr.bf16.gmra.mrb[0].mxu0 %v569
          %v614 = vpop.f32.mrb[0].mxu0
          %v615 = vadd.f32 %v533, %v614
          %v616 = vpop.f32.mrb[0].mxu0
          %v617 = vpop.f32.mrb[0].mxu0
          %v618 = vadd.f32 %v533, %v617
          %v619 = vpop.f32.mrb[0].mxu0
          %620 = vmatprep.mubr.bf16.mxu0 0
          %621 = vmatmul.mubr.bf16.gmra.mrb[0].mxu0 %v572
          %v622 = vpop.f32.mrb[0].mxu0
          %v623 = vadd.f32 %v533, %v622
          %v624 = vpop.f32.mrb[0].mxu0
          %v625 = vpop.f32.mrb[0].mxu0
          %v626 = vadd.f32 %v533, %v625
          %v627 = vpop.f32.mrb[0].mxu0
          %628 = vmatprep.mubr.bf16.mxu0 0
          %629 = vmatmul.mubr.bf16.gmra.mrb[0].mxu0 %v575
          %v630 = vpop.f32.mrb[0].mxu0
          %v631 = vadd.f32 %v533, %v630
          %v632 = vpop.f32.mrb[0].mxu0
          %v633 = vpop.f32.mrb[0].mxu0
          %v634 = vadd.f32 %v533, %v633
          %v635 = vpop.f32.mrb[0].mxu0
          %636 = vmatprep.mubr.bf16.mxu0 0
          %637 = vmatmul.mubr.bf16.gmra.mrb[0].mxu0 %v578
          %v638 = vpop.f32.mrb[0].mxu0
          %v639 = vadd.f32 %v533, %v638
          %v640 = vpop.f32.mrb[0].mxu0
          %v641 = vpop.f32.mrb[0].mxu0
          %v642 = vadd.f32 %v533, %v641
          %v643 = vpop.f32.mrb[0].mxu0
          %644 = vdwg.mxu0
          %v645 = vpack.c.bf16 %v618, %v615
          %v646 = vpack.c.bf16 %v626, %v623
          %v647 = vpack.c.bf16 %v634, %v631
          %v648 = vpack.c.bf16 %v642, %v639
          %vm649 = vcmask 130048
          %650 = vst.msk [vmem:[#allocation2] sm:$0xff] %vm649, %v645
          %651 = vst.msk [vmem:[#allocation2 + $0x8] sm:$0xff] %vm649, %v646
          %652 = vst.msk [vmem:[#allocation2 + $0x10] sm:$0xff] %vm649, %v647
          %653 = vst.msk [vmem:[#allocation2 + $0x18] sm:$0xff] %vm649, %v648
          %654 = vst.msk [vmem:[%s510] sm:$0xff] %vm649, 0.0
          %655 = vst.msk [vmem:[%s510 + $0x8] sm:$0xff] %vm649, 0.0
          %656 = vst.msk [vmem:[%s510 + $0x10] sm:$0xff] %vm649, 0.0
          %657 = vst.msk [vmem:[%s510 + $0x18] sm:$0xff] %vm649, 0.0
          %658 = vst.msk [vmem:[%s510 + $0x20] sm:$0xff] %vm649, 0.0
          %659 = vst.msk [vmem:[%s510 + $0x28] sm:$0xff] %vm649, 0.0
          %660 = vst.msk [vmem:[%s510 + $0x30] sm:$0xff] %vm649, 0.0
          %661 = vst.msk [vmem:[%s510 + $0x38] sm:$0xff] %vm649, 0.0
        $region60: #{tpu_custom_call.1} parent=55 // pred_fallthru
          _
        %v662 = vld [vmem:[%s474] sm:$0xf]
        %v663 = vld [vmem:[%s474 + $0x4] sm:$0xf]
        %v664 = vld [vmem:[%s474 + $0x8] sm:$0xf]
        %v665 = vld [vmem:[%s474 + $0xc] sm:$0xf]
        %v666 = vld [vmem:[%s474 + $0x10] sm:$0xf]
        %v667 = vld [vmem:[%s474 + $0x14] sm:$0xf]
        %v668 = vld [vmem:[%s474 + $0x18] sm:$0xf]
        %v669 = vld [vmem:[%s474 + $0x1c] sm:$0xf]
        %v670 = vld [vmem:[%s474 + $0x20] sm:$0xf]
        %v671 = vld [vmem:[%s474 + $0x24] sm:$0xf]
        %v672 = vld [vmem:[%s474 + $0x28] sm:$0xf]
        %v673 = vld [vmem:[%s474 + $0x2c] sm:$0xf]
        %v674 = vld [vmem:[%s474 + $0x30] sm:$0xf]
        %v675 = vld [vmem:[%s474 + $0x34] sm:$0xf]
        %v676 = vld [vmem:[%s474 + $0x38] sm:$0xf]
        %v677 = vld [vmem:[%s474 + $0x3c] sm:$0xf]
        %v678 = vld [vmem:[%s494] sm:$0xf]
        %v679 = vld [vmem:[%s494 + $0x4] sm:$0xf]
        %v680 = vld [vmem:[%s494 + $0x8] sm:$0xf]
        %v681 = vld [vmem:[%s494 + $0xc] sm:$0xf]
        %v682 = vld [vmem:[%s497] sm:$0x1]
        %v684 = vlaneseq
        %v685 = vshrl.u32 %v684, 7
        %v686 = vsub.s32 0, %v685
        %v687 = vrot.slane %v682, %v686
        %v705 = vunpack.c.l.b16 %v662
        %v706 = vunpack.c.l.b16 %v663
        %v707 = vunpack.c.l.b16 %v664
        %v708 = vunpack.c.l.b16 %v665
        %v709 = vunpack.c.l.b16 %v666
        %v710 = vunpack.c.l.b16 %v667
        %v711 = vunpack.c.l.b16 %v668
        %v712 = vunpack.c.l.b16 %v669
        %v713 = vunpack.c.l.b16 %v670
        %v714 = vunpack.c.l.b16 %v671
        %v715 = vunpack.c.l.b16 %v672
        %v716 = vunpack.c.l.b16 %v673
        %v717 = vunpack.c.l.b16 %v674
        %v718 = vunpack.c.l.b16 %v675
        %v719 = vunpack.c.l.b16 %v676
        %v720 = vunpack.c.l.b16 %v677
        %v721 = vpack.c.b16 %v706, %v705
        %v722 = vpack.c.b16 %v708, %v707
        %v723 = vpack.c.b16 %v710, %v709
        %v724 = vpack.c.b16 %v712, %v711
        %v725 = vpack.c.b16 %v714, %v713
        %v726 = vpack.c.b16 %v716, %v715
        %v727 = vpack.c.b16 %v718, %v717
        %v728 = vpack.c.b16 %v720, %v719
        %v733 = vunpack.c.l.b16 %v678
        %v734 = vunpack.c.l.b16 %v679
        %v735 = vunpack.c.l.b16 %v680
        %v736 = vunpack.c.l.b16 %v681
        %v737 = vpack.c.b16 %v734, %v733
        %v738 = vpack.c.b16 %v736, %v735
        %vm741 = vcmask 261120
        %v743 = vsel %vm741, %v721, 0
        %v746 = vsel %vm741, %v722, 0
        %v749 = vsel %vm741, %v723, 0
        %v752 = vsel %vm741, %v724, 0
        %v755 = vsel %vm741, %v725, 0
        %v758 = vsel %vm741, %v726, 0
        %v761 = vsel %vm741, %v727, 0
        %v764 = vsel %vm741, %v728, 0
        %766 = vmatprep.subr.bf16.mxu0 0
        %767 = vmatpush1.bf16.msra.mxu0 %v737
        %768 = vmatprep.subr.bf16.mxu0 0
        %769 = vmatpush1.bf16.msra.mxu0 %v738
        %770 = vmatprep.subr.bf16.mxu0 0
        %771 = vmatpush1.bf16.msra.mxu0 0
        %772 = vmatprep.subr.bf16.mxu0 0
        %773 = vmatpush1.bf16.msra.mxu0 0
        %774 = vmatprep.subr.bf16.mxu0 0
        %775 = vmatpush1.bf16.msra.mxu0 0
        %776 = vmatprep.subr.bf16.mxu0 0
        %777 = vmatpush1.bf16.msra.mxu0 0
        %778 = vmatprep.subr.bf16.mxu0 0
        %779 = vmatpush1.bf16.msra.mxu0 0
        %780 = vmatprep.subr.bf16.mxu0 0
        %781 = vmatpush1.bf16.msra.mxu0 0
        %782 = vmatprep.subr.bf16.mxu0 0
        %783 = vmatpush1.bf16.msra.mxu0 0
        %784 = vmatprep.subr.bf16.mxu0 0
        %785 = vmatpush1.bf16.msra.mxu0 0
        %786 = vmatprep.subr.bf16.mxu0 0
        %787 = vmatpush1.bf16.msra.mxu0 0
        %788 = vmatprep.subr.bf16.mxu0 0
        %789 = vmatpush1.bf16.msra.mxu0 0
        %790 = vmatprep.subr.bf16.mxu0 0
        %791 = vmatpush1.bf16.msra.mxu0 0
        %792 = vmatprep.subr.bf16.mxu0 0
        %793 = vmatpush1.bf16.msra.mxu0 0
        %794 = vmatprep.subr.bf16.mxu0 0
        %795 = vmatpush1.bf16.msra.mxu0 0
        %796 = vmatprep.subr.bf16.mxu0 0
        %797 = vmatpush1.bf16.msra.mxu0 0
        %798 = vmatprep.mubr.bf16.mxu0 0
        %799 = vmatmul.mubr.bf16.gmra.mrb[0].mxu0 %v743
        %v800 = vpop.f32.mrb[0].mxu0
        %v801 = vadd.f32 %v687, %v800
        %v802 = vpop.f32.mrb[0].mxu0
        %v803 = vpop.f32.mrb[0].mxu0
        %v804 = vadd.f32 %v687, %v803
        %v805 = vpop.f32.mrb[0].mxu0
        %806 = vmatprep.mubr.bf16.mxu0 0
        %807 = vmatmul.mubr.bf16.gmra.mrb[0].mxu0 %v746
        %v808 = vpop.f32.mrb[0].mxu0
        %v809 = vadd.f32 %v687, %v808
        %v810 = vpop.f32.mrb[0].mxu0
        %v811 = vpop.f32.mrb[0].mxu0
        %v812 = vadd.f32 %v687, %v811
        %v813 = vpop.f32.mrb[0].mxu0
        %814 = vmatprep.mubr.bf16.mxu0 0
        %815 = vmatmul.mubr.bf16.gmra.mrb[0].mxu0 %v749
        %v816 = vpop.f32.mrb[0].mxu0
        %v817 = vadd.f32 %v687, %v816
        %v818 = vpop.f32.mrb[0].mxu0
        %v819 = vpop.f32.mrb[0].mxu0
        %v820 = vadd.f32 %v687, %v819
        %v821 = vpop.f32.mrb[0].mxu0
        %822 = vmatprep.mubr.bf16.mxu0 0
        %823 = vmatmul.mubr.bf16.gmra.mrb[0].mxu0 %v752
        %v824 = vpop.f32.mrb[0].mxu0
        %v825 = vadd.f32 %v687, %v824
        %v826 = vpop.f32.mrb[0].mxu0
        %v827 = vpop.f32.mrb[0].mxu0
        %v828 = vadd.f32 %v687, %v827
        %v829 = vpop.f32.mrb[0].mxu0
        %830 = vmatprep.mubr.bf16.mxu0 0
        %831 = vmatmul.mubr.bf16.gmra.mrb[0].mxu0 %v755
        %v832 = vpop.f32.mrb[0].mxu0
        %v833 = vadd.f32 %v687, %v832
        %v834 = vpop.f32.mrb[0].mxu0
        %v835 = vpop.f32.mrb[0].mxu0
        %v836 = vadd.f32 %v687, %v835
        %v837 = vpop.f32.mrb[0].mxu0
        %838 = vmatprep.mubr.bf16.mxu0 0
        %839 = vmatmul.mubr.bf16.gmra.mrb[0].mxu0 %v758
        %v840 = vpop.f32.mrb[0].mxu0
        %v841 = vadd.f32 %v687, %v840
        %v842 = vpop.f32.mrb[0].mxu0
        %v843 = vpop.f32.mrb[0].mxu0
        %v844 = vadd.f32 %v687, %v843
        %v845 = vpop.f32.mrb[0].mxu0
        %846 = vmatprep.mubr.bf16.mxu0 0
        %847 = vmatmul.mubr.bf16.gmra.mrb[0].mxu0 %v761
        %v848 = vpop.f32.mrb[0].mxu0
        %v849 = vadd.f32 %v687, %v848
        %v850 = vpop.f32.mrb[0].mxu0
        %v851 = vpop.f32.mrb[0].mxu0
        %v852 = vadd.f32 %v687, %v851
        %v853 = vpop.f32.mrb[0].mxu0
        %854 = vmatprep.mubr.bf16.mxu0 0
        %855 = vmatmul.mubr.bf16.gmra.mrb[0].mxu0 %v764
        %v856 = vpop.f32.mrb[0].mxu0
        %v857 = vadd.f32 %v687, %v856
        %v858 = vpop.f32.mrb[0].mxu0
        %v859 = vpop.f32.mrb[0].mxu0
        %v860 = vadd.f32 %v687, %v859
        %v861 = vpop.f32.mrb[0].mxu0
        %862 = vdwg.mxu0
        %v863 = vpack.c.bf16 %v804, %v801
        %v864 = vpack.c.bf16 %v812, %v809
        %v865 = vpack.c.bf16 %v820, %v817
        %v866 = vpack.c.bf16 %v828, %v825
        %v867 = vpack.c.bf16 %v836, %v833
        %v868 = vpack.c.bf16 %v844, %v841
        %v869 = vpack.c.bf16 %v852, %v849
        %v870 = vpack.c.bf16 %v860, %v857
        %v871 = vld [vmem:[%s480] sm:$0xf]
        %v872 = vld [vmem:[%s480 + $0x4] sm:$0xf]
        %v873 = vld [vmem:[%s480 + $0x8] sm:$0xf]
        %v874 = vld [vmem:[%s480 + $0xc] sm:$0xf]
        %v875 = vld [vmem:[%s480 + $0x10] sm:$0xf]
        %v876 = vld [vmem:[%s480 + $0x14] sm:$0xf]
        %v877 = vld [vmem:[%s480 + $0x18] sm:$0xf]
        %v878 = vld [vmem:[%s480 + $0x1c] sm:$0xf]
        %v879 = vld [vmem:[%s480 + $0x20] sm:$0xf]
        %v880 = vld [vmem:[%s480 + $0x24] sm:$0xf]
        %v881 = vld [vmem:[%s480 + $0x28] sm:$0xf]
        %v882 = vld [vmem:[%s480 + $0x2c] sm:$0xf]
        %v883 = vld [vmem:[%s480 + $0x30] sm:$0xf]
        %v884 = vld [vmem:[%s480 + $0x34] sm:$0xf]
        %v885 = vld [vmem:[%s480 + $0x38] sm:$0xf]
        %v886 = vld [vmem:[%s480 + $0x3c] sm:$0xf]
        %v887 = vld [vmem:[%s502] sm:$0xf]
        %v888 = vld [vmem:[%s502 + $0x4] sm:$0xf]
        %v889 = vld [vmem:[%s502 + $0x8] sm:$0xf]
        %v890 = vld [vmem:[%s502 + $0xc] sm:$0xf]
        %v891 = vld [vmem:[%s505] sm:$0x1]
        %v893 = vlaneseq
        %v894 = vshrl.u32 %v893, 7
        %v895 = vsub.s32 0, %v894
        %v896 = vrot.slane %v891, %v895
        %v914 = vunpack.c.l.b16 %v871
        %v915 = vunpack.c.l.b16 %v872
        %v916 = vunpack.c.l.b16 %v873
        %v917 = vunpack.c.l.b16 %v874
        %v918 = vunpack.c.l.b16 %v875
        %v919 = vunpack.c.l.b16 %v876
        %v920 = vunpack.c.l.b16 %v877
        %v921 = vunpack.c.l.b16 %v878
        %v922 = vunpack.c.l.b16 %v879
        %v923 = vunpack.c.l.b16 %v880
        %v924 = vunpack.c.l.b16 %v881
        %v925 = vunpack.c.l.b16 %v882
        %v926 = vunpack.c.l.b16 %v883
        %v927 = vunpack.c.l.b16 %v884
        %v928 = vunpack.c.l.b16 %v885
        %v929 = vunpack.c.l.b16 %v886
        %v930 = vpack.c.b16 %v915, %v914
        %v931 = vpack.c.b16 %v917, %v916
        %v932 = vpack.c.b16 %v919, %v918
        %v933 = vpack.c.b16 %v921, %v920
        %v934 = vpack.c.b16 %v923, %v922
        %v935 = vpack.c.b16 %v925, %v924
        %v936 = vpack.c.b16 %v927, %v926
        %v937 = vpack.c.b16 %v929, %v928
        %v942 = vunpack.c.l.b16 %v887
        %v943 = vunpack.c.l.b16 %v888
        %v944 = vunpack.c.l.b16 %v889
        %v945 = vunpack.c.l.b16 %v890
        %v946 = vpack.c.b16 %v943, %v942
        %v947 = vpack.c.b16 %v945, %v944
        %v951 = vsel %vm741, %v930, 0
        %v954 = vsel %vm741, %v931, 0
        %v957 = vsel %vm741, %v932, 0
        %v960 = vsel %vm741, %v933, 0
        %v963 = vsel %vm741, %v934, 0
        %v966 = vsel %vm741, %v935, 0
        %v969 = vsel %vm741, %v936, 0
        %v972 = vsel %vm741, %v937, 0
        %974 = vmatprep.subr.bf16.mxu0 0
        %975 = vmatpush1.bf16.msra.mxu0 %v946
        %976 = vmatprep.subr.bf16.mxu0 0
        %977 = vmatpush1.bf16.msra.mxu0 %v947
        %978 = vmatprep.subr.bf16.mxu0 0
        %979 = vmatpush1.bf16.msra.mxu0 0
        %980 = vmatprep.subr.bf16.mxu0 0
        %981 = vmatpush1.bf16.msra.mxu0 0
        %982 = vmatprep.subr.bf16.mxu0 0
        %983 = vmatpush1.bf16.msra.mxu0 0
        %984 = vmatprep.subr.bf16.mxu0 0
        %985 = vmatpush1.bf16.msra.mxu0 0
        %986 = vmatprep.subr.bf16.mxu0 0
        %987 = vmatpush1.bf16.msra.mxu0 0
        %988 = vmatprep.subr.bf16.mxu0 0
        %989 = vmatpush1.bf16.msra.mxu0 0
        %990 = vmatprep.subr.bf16.mxu0 0
        %991 = vmatpush1.bf16.msra.mxu0 0
        %992 = vmatprep.subr.bf16.mxu0 0
        %993 = vmatpush1.bf16.msra.mxu0 0
        %994 = vmatprep.subr.bf16.mxu0 0
        %995 = vmatpush1.bf16.msra.mxu0 0
        %996 = vmatprep.subr.bf16.mxu0 0
        %997 = vmatpush1.bf16.msra.mxu0 0
        %998 = vmatprep.subr.bf16.mxu0 0
        %999 = vmatpush1.bf16.msra.mxu0 0
        %1000 = vmatprep.subr.bf16.mxu0 0
        %1001 = vmatpush1.bf16.msra.mxu0 0
        %1002 = vmatprep.subr.bf16.mxu0 0
        %1003 = vmatpush1.bf16.msra.mxu0 0
        %1004 = vmatprep.subr.bf16.mxu0 0
        %1005 = vmatpush1.bf16.msra.mxu0 0
        %1006 = vmatprep.mubr.bf16.mxu0 0
        %1007 = vmatmul.mubr.bf16.gmra.mrb[0].mxu0 %v951
        %v1008 = vpop.f32.mrb[0].mxu0
        %v1009 = vadd.f32 %v896, %v1008
        %v1010 = vpop.f32.mrb[0].mxu0
        %v1011 = vpop.f32.mrb[0].mxu0
        %v1012 = vadd.f32 %v896, %v1011
        %v1013 = vpop.f32.mrb[0].mxu0
        %1014 = vmatprep.mubr.bf16.mxu0 0
        %1015 = vmatmul.mubr.bf16.gmra.mrb[0].mxu0 %v954
        %v1016 = vpop.f32.mrb[0].mxu0
        %v1017 = vadd.f32 %v896, %v1016
        %v1018 = vpop.f32.mrb[0].mxu0
        %v1019 = vpop.f32.mrb[0].mxu0
        %v1020 = vadd.f32 %v896, %v1019
        %v1021 = vpop.f32.mrb[0].mxu0
        %1022 = vmatprep.mubr.bf16.mxu0 0
        %1023 = vmatmul.mubr.bf16.gmra.mrb[0].mxu0 %v957
        %v1024 = vpop.f32.mrb[0].mxu0
        %v1025 = vadd.f32 %v896, %v1024
        %v1026 = vpop.f32.mrb[0].mxu0
        %v1027 = vpop.f32.mrb[0].mxu0
        %v1028 = vadd.f32 %v896, %v1027
        %v1029 = vpop.f32.mrb[0].mxu0
        %1030 = vmatprep.mubr.bf16.mxu0 0
        %1031 = vmatmul.mubr.bf16.gmra.mrb[0].mxu0 %v960
        %v1032 = vpop.f32.mrb[0].mxu0
        %v1033 = vadd.f32 %v896, %v1032
        %v1034 = vpop.f32.mrb[0].mxu0
        %v1035 = vpop.f32.mrb[0].mxu0
        %v1036 = vadd.f32 %v896, %v1035
        %v1037 = vpop.f32.mrb[0].mxu0
        %1038 = vmatprep.mubr.bf16.mxu0 0
        %1039 = vmatmul.mubr.bf16.gmra.mrb[0].mxu0 %v963
        %v1040 = vpop.f32.mrb[0].mxu0
        %v1041 = vadd.f32 %v896, %v1040
        %v1042 = vpop.f32.mrb[0].mxu0
        %v1043 = vpop.f32.mrb[0].mxu0
        %v1044 = vadd.f32 %v896, %v1043
        %v1045 = vpop.f32.mrb[0].mxu0
        %1046 = vmatprep.mubr.bf16.mxu0 0
        %1047 = vmatmul.mubr.bf16.gmra.mrb[0].mxu0 %v966
        %v1048 = vpop.f32.mrb[0].mxu0
        %v1049 = vadd.f32 %v896, %v1048
        %v1050 = vpop.f32.mrb[0].mxu0
        %v1051 = vpop.f32.mrb[0].mxu0
        %v1052 = vadd.f32 %v896, %v1051
        %v1053 = vpop.f32.mrb[0].mxu0
        %1054 = vmatprep.mubr.bf16.mxu0 0
        %1055 = vmatmul.mubr.bf16.gmra.mrb[0].mxu0 %v969
        %v1056 = vpop.f32.mrb[0].mxu0
        %v1057 = vadd.f32 %v896, %v1056
        %v1058 = vpop.f32.mrb[0].mxu0
        %v1059 = vpop.f32.mrb[0].mxu0
        %v1060 = vadd.f32 %v896, %v1059
        %v1061 = vpop.f32.mrb[0].mxu0
        %1062 = vmatprep.mubr.bf16.mxu0 0
        %1063 = vmatmul.mubr.bf16.gmra.mrb[0].mxu0 %v972
        %v1064 = vpop.f32.mrb[0].mxu0
        %v1065 = vadd.f32 %v896, %v1064
        %v1066 = vpop.f32.mrb[0].mxu0
        %v1067 = vpop.f32.mrb[0].mxu0
        %v1068 = vadd.f32 %v896, %v1067
        %v1069 = vpop.f32.mrb[0].mxu0
        %1070 = vdwg.mxu0
        %v1071 = vpack.c.bf16 %v1012, %v1009
        %v1072 = vpack.c.bf16 %v1020, %v1017
        %v1073 = vpack.c.bf16 %v1028, %v1025
        %v1074 = vpack.c.bf16 %v1036, %v1033
        %v1075 = vpack.c.bf16 %v1044, %v1041
        %v1076 = vpack.c.bf16 %v1052, %v1049
        %v1077 = vpack.c.bf16 %v1060, %v1057
        %v1078 = vpack.c.bf16 %v1068, %v1065
        %v1079 = vld [vmem:[#allocation2] sm:$0xff]
        %v1080 = vld [vmem:[#allocation2 + $0x8] sm:$0xff]
        %v1081 = vld [vmem:[#allocation2 + $0x10] sm:$0xff]
        %v1082 = vld [vmem:[#allocation2 + $0x18] sm:$0xff]
        %vm1083 = vcmask 130048
        %v1085 = vsel %vm1083, %v1079, 0
        %v1088 = vsel %vm1083, %v1080, 0
        %v1091 = vsel %vm1083, %v1081, 0
        %v1094 = vsel %vm1083, %v1082, 0
        %v1097 = vsel %vm1083, %v863, 0
        %v1100 = vsel %vm1083, %v864, 0
        %v1103 = vsel %vm1083, %v865, 0
        %v1106 = vsel %vm1083, %v866, 0
        %v1109 = vsel %vm1083, %v867, 0
        %v1112 = vsel %vm1083, %v868, 0
        %v1115 = vsel %vm1083, %v869, 0
        %v1118 = vsel %vm1083, %v870, 0
        %1120 = vmatprep.subr.bf16.mxu0 0
        %1121 = vmatpush1.bf16.xpose.msra.mxu0 %v1097
        %1122 = vmatprep.subr.bf16.mxu0 0
        %1123 = vmatpush1.bf16.xpose.msra.mxu0 %v1100
        %1124 = vmatprep.subr.bf16.mxu0 0
        %1125 = vmatpush1.bf16.xpose.msra.mxu0 %v1103
        %1126 = vmatprep.subr.bf16.mxu0 0
        %1127 = vmatpush1.bf16.xpose.msra.mxu0 %v1106
        %1128 = vmatprep.subr.bf16.mxu0 0
        %1129 = vmatpush1.bf16.xpose.msra.mxu0 %v1109
        %1130 = vmatprep.subr.bf16.mxu0 0
        %1131 = vmatpush1.bf16.xpose.msra.mxu0 %v1112
        %1132 = vmatprep.subr.bf16.mxu0 0
        %1133 = vmatpush1.bf16.xpose.msra.mxu0 %v1115
        %1134 = vmatprep.subr.bf16.mxu0 0
        %1135 = vmatpush1.bf16.xpose.msra.mxu0 %v1118
        %1136 = vmatprep.subr.bf16.mxu0 0
        %1137 = vmatpush1.bf16.xpose.msra.mxu0 0
        %1138 = vmatprep.subr.bf16.mxu0 0
        %1139 = vmatpush1.bf16.xpose.msra.mxu0 0
        %1140 = vmatprep.subr.bf16.mxu0 0
        %1141 = vmatpush1.bf16.xpose.msra.mxu0 0
        %1142 = vmatprep.subr.bf16.mxu0 0
        %1143 = vmatpush1.bf16.xpose.msra.mxu0 0
        %1144 = vmatprep.subr.bf16.mxu0 0
        %1145 = vmatpush1.bf16.xpose.msra.mxu0 0
        %1146 = vmatprep.subr.bf16.mxu0 0
        %1147 = vmatpush1.bf16.xpose.msra.mxu0 0
        %1148 = vmatprep.subr.bf16.mxu0 0
        %1149 = vmatpush1.bf16.xpose.msra.mxu0 0
        %1150 = vmatprep.subr.bf16.mxu0 0
        %1151 = vmatpush1.bf16.xpose.msra.mxu0 0
        %1152 = vmatprep.mubr.bf16.mxu0 0
        %1153 = vmatmul.mubr.bf16.gmra.mrb[0].mxu0 %v1085
        %v1154 = vpop.f32.mrb[0].mxu0
        %v1155 = vadd.f32 0.0, %v1154
        %v1156 = vpop.f32.mrb[0].mxu0
        %v1157 = vpop.f32.mrb[0].mxu0
        %v1158 = vadd.f32 0.0, %v1157
        %v1159 = vpop.f32.mrb[0].mxu0
        %1160 = vmatprep.mubr.bf16.mxu0 0
        %1161 = vmatmul.mubr.bf16.gmra.mrb[0].mxu0 %v1088
        %v1162 = vpop.f32.mrb[0].mxu0
        %v1163 = vadd.f32 0.0, %v1162
        %v1164 = vpop.f32.mrb[0].mxu0
        %v1165 = vpop.f32.mrb[0].mxu0
        %v1166 = vadd.f32 0.0, %v1165
        %v1167 = vpop.f32.mrb[0].mxu0
        %1168 = vmatprep.mubr.bf16.mxu0 0
        %1169 = vmatmul.mubr.bf16.gmra.mrb[0].mxu0 %v1091
        %v1170 = vpop.f32.mrb[0].mxu0
        %v1171 = vadd.f32 0.0, %v1170
        %v1172 = vpop.f32.mrb[0].mxu0
        %v1173 = vpop.f32.mrb[0].mxu0
        %v1174 = vadd.f32 0.0, %v1173
        %v1175 = vpop.f32.mrb[0].mxu0
        %1176 = vmatprep.mubr.bf16.mxu0 0
        %1177 = vmatmul.mubr.bf16.gmra.mrb[0].mxu0 %v1094
        %v1178 = vpop.f32.mrb[0].mxu0
        %v1179 = vadd.f32 0.0, %v1178
        %v1180 = vpop.f32.mrb[0].mxu0
        %v1181 = vpop.f32.mrb[0].mxu0
        %v1182 = vadd.f32 0.0, %v1181
        %v1183 = vpop.f32.mrb[0].mxu0
        %1184 = vdwg.mxu0
        %v1185 = vmul.f32 %v1155, 0.25
        %v1186 = vmul.f32 %v1158, 0.25
        %v1187 = vmul.f32 %v1163, 0.25
        %v1188 = vmul.f32 %v1166, 0.25
        %v1189 = vmul.f32 %v1171, 0.25
        %v1190 = vmul.f32 %v1174, 0.25
        %v1191 = vmul.f32 %v1179, 0.25
        %v1192 = vmul.f32 %v1182, 0.25
        %v1193 = vmax.f32 %v1185, %v1189
        %v1194 = vmax.f32 %v1186, %v1190
        %v1195 = vmax.f32 %v1187, %v1191
        %v1196 = vmax.f32 %v1188, %v1192
        %v1197 = vmax.f32 %v1193, %v1194
        %v1198 = vmax.f32 %v1195, %v1196
        %v1199 = vmax.f32 %v1197, %v1198
        %v1200 = vrot.slane %v1199, 4
        %v1201 = vmax.f32 %v1199, %v1200
        %v1202 = vrot.slane %v1201, 2
        %v1203 = vmax.f32 %v1201, %v1202
        %v1204 = vrot.slane %v1203, 1
        %v1205 = vmax.f32 %v1203, %v1204
        %v1206 = vsub.f32 %v1185, %v1205
        %v1207 = vsub.f32 %v1186, %v1205
        %v1208 = vsub.f32 %v1187, %v1205
        %v1209 = vsub.f32 %v1188, %v1205
        %v1210 = vsub.f32 %v1189, %v1205
        %v1211 = vsub.f32 %v1190, %v1205
        %v1212 = vsub.f32 %v1191, %v1205
        %v1213 = vsub.f32 %v1192, %v1205
        %v1214 = vmul.f32 %v1206, 1.442695
        %v1215 = vpow.pop %v1214
        %v1216 = vmul.f32 %v1207, 1.442695
        %v1217 = vpow.pop %v1216
        %v1218 = vmul.f32 %v1208, 1.442695
        %v1219 = vpow.pop %v1218
        %v1220 = vmul.f32 %v1209, 1.442695
        %v1221 = vpow.pop %v1220
        %v1222 = vmul.f32 %v1210, 1.442695
        %v1223 = vpow.pop %v1222
        %v1224 = vmul.f32 %v1211, 1.442695
        %v1225 = vpow.pop %v1224
        %v1226 = vmul.f32 %v1212, 1.442695
        %v1227 = vpow.pop %v1226
        %v1228 = vmul.f32 %v1213, 1.442695
        %v1229 = vpow.pop %v1228
        %v1230 = vadd.f32 %v1215, %v1217
        %v1231 = vadd.f32 %v1230, %v1219
        %v1232 = vadd.f32 %v1231, %v1221
        %v1233 = vadd.f32 %v1232, %v1223
        %v1234 = vadd.f32 %v1233, %v1225
        %v1235 = vadd.f32 %v1234, %v1227
        %v1236 = vadd.f32 %v1235, %v1229
        %v1237 = vrot.slane %v1236, 4
        %v1238 = vadd.f32 %v1236, %v1237
        %v1239 = vrot.slane %v1238, 2
        %v1240 = vadd.f32 %v1238, %v1239
        %v1241 = vrot.slane %v1240, 1
        %v1242 = vadd.f32 %v1240, %v1241
        %v1243 = vrcp.pop %v1242
        %v1244 = vmul.f32 %v1215, %v1243
        %v1245 = vmul.f32 %v1217, %v1243
        %v1246 = vmul.f32 %v1219, %v1243
        %v1247 = vmul.f32 %v1221, %v1243
        %v1248 = vmul.f32 %v1223, %v1243
        %v1249 = vmul.f32 %v1225, %v1243
        %v1250 = vmul.f32 %v1227, %v1243
        %v1251 = vmul.f32 %v1229, %v1243
        %1252 = vst [vmem:[%s462] sm:$0xff] %v1244
        %1253 = vst [vmem:[%s462 + $0x8] sm:$0xff] %v1245
        %1254 = vst [vmem:[%s462 + $0x10] sm:$0xff] %v1246
        %1255 = vst [vmem:[%s462 + $0x18] sm:$0xff] %v1247
        %1256 = vst [vmem:[%s462 + $0x20] sm:$0xff] %v1248
        %1257 = vst [vmem:[%s462 + $0x28] sm:$0xff] %v1249
        %1258 = vst [vmem:[%s462 + $0x30] sm:$0xff] %v1250
        %1259 = vst [vmem:[%s462 + $0x38] sm:$0xff] %v1251
        %v1260 = vld [vmem:[%s510] sm:$0xff]
        %v1261 = vld [vmem:[%s510 + $0x8] sm:$0xff]
        %v1262 = vld [vmem:[%s510 + $0x10] sm:$0xff]
        %v1263 = vld [vmem:[%s510 + $0x18] sm:$0xff]
        %v1264 = vld [vmem:[%s510 + $0x20] sm:$0xff]
        %v1265 = vld [vmem:[%s510 + $0x28] sm:$0xff]
        %v1266 = vld [vmem:[%s510 + $0x30] sm:$0xff]
        %v1267 = vld [vmem:[%s510 + $0x38] sm:$0xff]
        %v1268 = vpack.c.bf16 %v1245, %v1244
        %v1269 = vpack.c.bf16 %v1247, %v1246
        %v1270 = vpack.c.bf16 %v1249, %v1248
        %v1271 = vpack.c.bf16 %v1251, %v1250
        %1272 = vmatprep.subr.bf16.mxu0 0
        %1273 = vmatpush1.bf16.msra.mxu0 %v1071
        %1274 = vmatprep.subr.bf16.mxu0 0
        %1275 = vmatpush1.bf16.msra.mxu0 %v1072
        %1276 = vmatprep.subr.bf16.mxu0 0
        %1277 = vmatpush1.bf16.msra.mxu0 %v1073
        %1278 = vmatprep.subr.bf16.mxu0 0
        %1279 = vmatpush1.bf16.msra.mxu0 %v1074
        %1280 = vmatprep.subr.bf16.mxu0 0
        %1281 = vmatpush1.bf16.msra.mxu0 %v1075
        %1282 = vmatprep.subr.bf16.mxu0 0
        %1283 = vmatpush1.bf16.msra.mxu0 %v1076
        %1284 = vmatprep.subr.bf16.mxu0 0
        %1285 = vmatpush1.bf16.msra.mxu0 %v1077
        %1286 = vmatprep.subr.bf16.mxu0 0
        %1287 = vmatpush1.bf16.msra.mxu0 %v1078
        %1288 = vmatprep.subr.bf16.mxu0 0
        %1289 = vmatpush1.bf16.msra.mxu0 0
        %1290 = vmatprep.subr.bf16.mxu0 0
        %1291 = vmatpush1.bf16.msra.mxu0 0
        %1292 = vmatprep.subr.bf16.mxu0 0
        %1293 = vmatpush1.bf16.msra.mxu0 0
        %1294 = vmatprep.subr.bf16.mxu0 0
        %1295 = vmatpush1.bf16.msra.mxu0 0
        %1296 = vmatprep.subr.bf16.mxu0 0
        %1297 = vmatpush1.bf16.msra.mxu0 0
        %1298 = vmatprep.subr.bf16.mxu0 0
        %1299 = vmatpush1.bf16.msra.mxu0 0
        %1300 = vmatprep.subr.bf16.mxu0 0
        %1301 = vmatpush1.bf16.msra.mxu0 0
        %1302 = vmatprep.subr.bf16.mxu0 0
        %1303 = vmatpush1.bf16.msra.mxu0 0
        %1304 = vmatprep.mubr.bf16.mxu0 0
        %1305 = vmatmul.mubr.bf16.gmra.mrb[0].mxu0 %v1268
        %v1306 = vpop.f32.mrb[0].mxu0
        %v1307 = vadd.f32 0.0, %v1306
        %v1308 = vpop.f32.mrb[0].mxu0
        %v1309 = vpop.f32.mrb[0].mxu0
        %v1310 = vadd.f32 0.0, %v1309
        %v1311 = vpop.f32.mrb[0].mxu0
        %1312 = vmatprep.mubr.bf16.mxu0 0
        %1313 = vmatmul.mubr.bf16.gmra.mrb[0].mxu0 %v1269
        %v1314 = vpop.f32.mrb[0].mxu0
        %v1315 = vadd.f32 0.0, %v1314
        %v1316 = vpop.f32.mrb[0].mxu0
        %v1317 = vpop.f32.mrb[0].mxu0
        %v1318 = vadd.f32 0.0, %v1317
        %v1319 = vpop.f32.mrb[0].mxu0
        %1320 = vmatprep.mubr.bf16.mxu0 0
        %1321 = vmatmul.mubr.bf16.gmra.mrb[0].mxu0 %v1270
        %v1322 = vpop.f32.mrb[0].mxu0
        %v1323 = vadd.f32 0.0, %v1322
        %v1324 = vpop.f32.mrb[0].mxu0
        %v1325 = vpop.f32.mrb[0].mxu0
        %v1326 = vadd.f32 0.0, %v1325
        %v1327 = vpop.f32.mrb[0].mxu0
        %1328 = vmatprep.mubr.bf16.mxu0 0
        %1329 = vmatmul.mubr.bf16.gmra.mrb[0].mxu0 %v1271
        %v1330 = vpop.f32.mrb[0].mxu0
        %v1331 = vadd.f32 0.0, %v1330
        %v1332 = vpop.f32.mrb[0].mxu0
        %v1333 = vpop.f32.mrb[0].mxu0
        %v1334 = vadd.f32 0.0, %v1333
        %v1335 = vpop.f32.mrb[0].mxu0
        %1336 = vdwg.mxu0
        %v1337 = vadd.f32 %v1260, %v1307
        %v1338 = vadd.f32 %v1261, %v1310
        %v1339 = vadd.f32 %v1262, %v1315
        %v1340 = vadd.f32 %v1263, %v1318
        %v1341 = vadd.f32 %v1264, %v1323
        %v1342 = vadd.f32 %v1265, %v1326
        %v1343 = vadd.f32 %v1266, %v1331
        %v1344 = vadd.f32 %v1267, %v1334
        %1345 = vst.msk [vmem:[%s510] sm:$0xff] %vm1083, %v1337
        %1346 = vst.msk [vmem:[%s510 + $0x8] sm:$0xff] %vm1083, %v1338
        %1347 = vst.msk [vmem:[%s510 + $0x10] sm:$0xff] %vm1083, %v1339
        %1348 = vst.msk [vmem:[%s510 + $0x18] sm:$0xff] %vm1083, %v1340
        %1349 = vst.msk [vmem:[%s510 + $0x20] sm:$0xff] %vm1083, %v1341
        %1350 = vst.msk [vmem:[%s510 + $0x28] sm:$0xff] %vm1083, %v1342
        %1351 = vst.msk [vmem:[%s510 + $0x30] sm:$0xff] %vm1083, %v1343
        %1352 = vst.msk [vmem:[%s510 + $0x38] sm:$0xff] %vm1083, %v1344
        %s1353 = sand.u32 %s276, 1
        %s1354 = scalar_lea.sflag [#allocation4], %s1353
        %s1355 = sand.u32 %s276, 1
        %s1356 = smul.addr %s1355, 64
        %s1357 = scalar_lea.vmem [#allocation3], %s1356
        %p1358 = scmp.lt.s32.totalorder %s29, 3
        %s1359 = scalar_select %p1358, %s29, 3
        %s1360 = smul.addr %s1359, 8
        %s1361 = smul.addr %s1360, 8
        %s1362 = scalar_lea.vmem %s10, %s1361
        // Predicated region
        $region61: #{tpu_custom_call.1} parent=55 // pred_check
          %p1363 = pneg %p286
        $region62: #{tpu_custom_call.1} parent=55 // pred_check_branch
          %1365 = sbr.rel (%p1363) target = $region64
        $region63: #{tpu_custom_call.1} parent=55 // pred_region
          %s1367 = ssub.s32 1024, 1024
          %1368 = vsyncadd %s1354, %s1367
          %s1369 = smul.addr %s29, 16
          %s1370 = sadd.s32 %s30, %s1369
          %s1371 = smul.addr %s1370, 128
          %s1372 = scalar_lea.hbm %s9, %s1371
          %s1373 = sshll.u32 %s1357, 4
          %s1374 = int_to_ptr.vmem [resolvable:$true] %s1373
          %1379 = dma.vmem_to_hbm [thread:$0]  %s1374, 1024, %s1372, %s1354, 128, 256, 8
        $region64: #{tpu_custom_call.1} parent=55 // pred_fallthru
          _
        // Predicated region
        $region65: #{tpu_custom_call.1} parent=55 // pred_check
          %p1380 = pneg %p312
        $region66: #{tpu_custom_call.1} parent=55 // pred_check_branch
          %1382 = sbr.rel (%p1380) target = $region68
        $region67: #{tpu_custom_call.1} parent=55 // pred_region
          _
        $region68: #{tpu_custom_call.1} parent=55 // pred_fallthru
          _
      $region56: #{tpu_custom_call.1} parent=5 // pred_fallthru
        _
      %p1383 = scmp.le.s32.totalorder 2, %s20
      // Predicated region
      $region69: #{tpu_custom_call.1} parent=5 // pred_check
        %p1384 = pneg %p1383
      $region70: #{tpu_custom_call.1} parent=5 // pred_check_branch
        %1386 = sbr.rel (%p1384) target = $region72
      $region71: #{tpu_custom_call.1} parent=5 // pred_region
        %s1387 = ssub.s32 %s20, 2
        // Predicated region
        $region73: #{tpu_custom_call.1} parent=71 // pred_check
          %p1388 = pneg %p292
        $region74: #{tpu_custom_call.1} parent=71 // pred_check_branch
          %1390 = sbr.rel (%p1388) target = $region76
        $region75: #{tpu_custom_call.1} parent=71 // pred_region
          %s1391 = sand.u32 %s277, 1
          %s1392 = scalar_lea.sflag [#allocation4], %s1391
          %s1393 = sand.u32 %s277, 1
          %s1394 = smul.addr %s1393, 64
          %s1395 = scalar_lea.vmem [#allocation3], %s1394
          %1396 = dma.done %s1392, 1024
        $region76: #{tpu_custom_call.1} parent=71 // pred_fallthru
          _
        // Predicated region
        $region77: #{tpu_custom_call.1} parent=71 // pred_check
          %p1397 = pneg %p318
        $region78: #{tpu_custom_call.1} parent=71 // pred_check_branch
          %1399 = sbr.rel (%p1397) target = $region80
        $region79: #{tpu_custom_call.1} parent=71 // pred_region
          %p1400 = scmp.lt.s32.totalorder %s31, 3
          %s1401 = scalar_select %p1400, %s31, 3
          %s1402 = smul.addr %s1401, 8
          %s1403 = smul.addr %s1402, 8
          %s1404 = scalar_lea.vmem %s10, %s1403
        $region80: #{tpu_custom_call.1} parent=71 // pred_fallthru
          _
      $region72: #{tpu_custom_call.1} parent=5 // pred_fallthru
        _
    $region6: #{tpu_custom_call.1} parent=1 // loop_footer
      %s24 = sadd.s32 1, %s20
    $region7: #{tpu_custom_call.1} parent=1 // loop_footer_branch
      %19 = sbr.rel target = $region3
    $region8: #{tpu_custom_call.1} parent=1 // loop_exit
      _
    %1405 = vsyncpa [#allocation4], 1
    %s1406 = scalar_lea.sflag [#allocation4], 1
    %1407 = vsyncpa %s1406, 1

</llo_original>
